<compile_context>
chip_gen: v6e
topology: v6e:2x2x1
jax: 0.10.0
libtpu: 0.0.40
codegen_flags: <defaults>
</compile_context>

<pallas_src>
import functools

import jax
import jax.numpy as jnp
from jax import lax
from jax.experimental import pallas as pl
from jax.experimental.pallas import tpu as pltpu

LN_EPS = 1e-5
BN_EPS = 1e-5


def _single_core_chip() -> bool:
    """True for TPU generations with a single TensorCore per chip (v5e, v6e)."""
    try:
        kind = jax.devices()[0].device_kind.lower()
    except Exception:
        return False
    return any(tag in kind for tag in ("v5 lite", "v5e", "v6 lite", "v6e"))


def _samples_per_block(n: int) -> int:
    # Single-TC chips: one block holding the whole batch (no per-step grid
    # overhead, better pipelining).  Multi-core chips: one sample per grid
    # step so the "parallel" axis spreads work across cores.
    if _single_core_chip():
        return n
    return 1


# ----------------------------------------------------------------------------
# Combine_block:
#   result = cat([x, y], dim=1)           (ConcatLayer assumed = channel concat)
#   result = dw_conv(result)              1x1 depthwise conv -> per-channel scale+bias
#   result = point_conv(result)           1x1 conv -> channel matmul
#   result = LayerNorm([C, 7, 7])(result) normalize over (C,H,W) per sample
#
# Kernel form (after wrapper-side algebra):
#   z = x_res @ Wx' + x_vit @ Wy' + b'    (Wx'/Wy' have dw_conv folded in)
#   out = LayerNorm(z) * ln_g + ln_b
# ----------------------------------------------------------------------------
def combine_block_kernel(xr_ref, xv_ref, wx_ref, wy_ref, b_ref,
                         ln_g_ref, ln_b_ref, o_ref):
    S = xr_ref.shape[0]                       # samples resident in this block
    inv_n = 1.0 / float(ln_g_ref.shape[0] * ln_g_ref.shape[1])
    for s in range(S):                        # static unroll (S is 1 or N)
        # bf16 operands (pre-cast in wrapper) feed the MXU; accumulate in f32.
        z = jnp.dot(xr_ref[s], wx_ref[...], preferred_element_type=jnp.float32)
        z = z + jnp.dot(xv_ref[s], wy_ref[...], preferred_element_type=jnp.float32)
        z = z + b_ref[...]                    # fused dw+pw bias (f32)

        # Per-sample LayerNorm over (HW, C); mean-shifted two-pass for
        # numerical robustness (data is VMEM-resident, cost is noise).
        mean = jnp.sum(z) * inv_n
        zc = z - mean
        var = jnp.sum(zc * zc) * inv_n
        zn = zc * lax.rsqrt(var + LN_EPS)
        o_ref[s] = (zn * ln_g_ref[...] + ln_b_ref[...]).astype(o_ref.dtype)


@functools.partial(jax.jit, static_argnums=(3,))
def _combine_block_impl(res, vit, params, channels_last):
    if channels_last:
        N, H, W, Cx = res.shape
        Cy = vit.shape[-1]
        xr_tok = res.reshape(N, H * W, Cx).astype(jnp.bfloat16)
        xv_tok = vit.reshape(N, H * W, Cy).astype(jnp.bfloat16)
    else:
        N, Cx, H, W = res.shape
        Cy = vit.shape[1]
        # transpose + bf16 cast fuse into one XLA pass under jit.
        xr_tok = res.transpose(0, 2, 3, 1).reshape(N, H * W, Cx).astype(jnp.bfloat16)
        xv_tok = vit.transpose(0, 2, 3, 1).reshape(N, H * W, Cy).astype(jnp.bfloat16)
    C = Cx + Cy
    HW = H * W

    # Fold depthwise 1x1 conv (per-channel scale+bias) into the pointwise
    # weight, then split rows so the channel concat happens implicitly via
    # two MXU dots inside the kernel.
    wt = params["pw_w"].astype(jnp.float32).T                     # (Cin, Cout)
    dw_w = params["dw_w"].astype(jnp.float32)
    w_fused = dw_w[:, None] * wt                                  # diag(dw_w) @ Wt
    w_x = w_fused[:Cx].astype(jnp.bfloat16)                       # (Cx, C)
    w_y = w_fused[Cx:].astype(jnp.bfloat16)                       # (Cy, C)
    b_fused = (params["dw_b"] @ wt + params["pw_b"]).reshape(1, C).astype(jnp.float32)

    # LayerNorm affine is (C, 7, 7) in torch -> token layout (HW, C).
    ln_g = params["ln_g"].transpose(1, 2, 0).reshape(HW, C).astype(jnp.float32)
    ln_b = params["ln_b"].transpose(1, 2, 0).reshape(HW, C).astype(jnp.float32)

    S = _samples_per_block(N)
    if N % S:
        S = 1                                                     # safe fallback
    grid = (N // S,)

    out_tok = pl.pallas_call(
        combine_block_kernel,
        out_shape=jax.ShapeDtypeStruct((N, HW, C), jnp.bfloat16),
        grid=grid,
        in_specs=[
            pl.BlockSpec((S, HW, Cx), lambda n: (n, 0, 0)),
            pl.BlockSpec((S, HW, Cy), lambda n: (n, 0, 0)),
            pl.BlockSpec((Cx, C), lambda n: (0, 0)),
            pl.BlockSpec((Cy, C), lambda n: (0, 0)),
            pl.BlockSpec((1, C), lambda n: (0, 0)),
            pl.BlockSpec((HW, C), lambda n: (0, 0)),
            pl.BlockSpec((HW, C), lambda n: (0, 0)),
        ],
        out_specs=pl.BlockSpec((S, HW, C), lambda n: (n, 0, 0)),
        compiler_params=pltpu.CompilerParams(
            dimension_semantics=("parallel",)),
    )(xr_tok, xv_tok, w_x, w_y, b_fused, ln_g, ln_b)

    out = out_tok.reshape(N, H, W, C)
    if not channels_last:
        out = out.transpose(0, 3, 1, 2)       # single bf16 transpose pass
    return out


def combine_block(res, vit, params, channels_last=False):
    """res: (N,Cx,7,7) vit: (N,Cy,7,7) -> (N,Cx+Cy,7,7) bf16.
    With channels_last=True, inputs/outputs are NHWC and no transposes run."""
    return _combine_block_impl(res, vit, params, channels_last)


# ----------------------------------------------------------------------------
# Interactive_block tail (the part whose definition is available):
#   result = downchannel(attn_out)   1x1 conv (Cx+Cy -> Cout)
#   result = skip + result           residual (x if index==0 else y)
#   result = relu(result)
#   result = BatchNorm2d(result)     eval-mode running statistics (pre-folded)
# TODO(synk): InterleavedLayer / CascadedGroupAttention producing attn_out are
#             undefined in the source; training-mode BN batch stats not modeled.
# ----------------------------------------------------------------------------
def interactive_tail_kernel(a_ref, skip_ref, w_ref, b_ref,
                            bn_sc_ref, bn_sh_ref, o_ref):
    S = a_ref.shape[0]
    for s in range(S):                        # static unroll (S is 1 or N)
        z = jnp.dot(a_ref[s], w_ref[...],
                    preferred_element_type=jnp.float32) + b_ref[...]   # 1x1 conv
        z = jnp.maximum(skip_ref[s] + z, 0.0)                          # res + ReLU
        o_ref[s] = (z * bn_sc_ref[...] + bn_sh_ref[...]).astype(o_ref.dtype)


@functools.partial(jax.jit, static_argnums=(3,))
def _interactive_tail_impl(attn_out, skip, params, channels_last):
    if channels_last:
        N, H, W, Cin = attn_out.shape
        Cout = skip.shape[-1]
        a_tok = attn_out.reshape(N, H * W, Cin).astype(jnp.bfloat16)
        s_tok = skip.reshape(N, H * W, Cout).astype(jnp.bfloat16)
    else:
        N, Cin, H, W = attn_out.shape
        Cout = skip.shape[1]
        a_tok = attn_out.transpose(0, 2, 3, 1).reshape(N, H * W, Cin).astype(jnp.bfloat16)
        s_tok = skip.transpose(0, 2, 3, 1).reshape(N, H * W, Cout).astype(jnp.bfloat16)
    HW = H * W

    wt = params["w"].astype(jnp.float32).T.astype(jnp.bfloat16)    # (Cin, Cout)
    b = params["b"].reshape(1, Cout).astype(jnp.float32)
    # Pre-fold eval-mode BatchNorm into a single scale/shift pair.
    bn_scale = params["bn_g"] * lax.rsqrt(params["bn_v"] + BN_EPS)
    bn_shift = params["bn_b"] - params["bn_m"] * bn_scale
    bn_scale = bn_scale.reshape(1, Cout).astype(jnp.float32)
    bn_shift = bn_shift.reshape(1, Cout).astype(jnp.float32)

    S = _samples_per_block(N)
    if N % S:
        S = 1
    grid = (N // S,)

    out_tok = pl.pallas_call(
        interactive_tail_kernel,
        out_shape=jax.ShapeDtypeStruct((N, HW, Cout), jnp.bfloat16),
        grid=grid,
        in_specs=[
            pl.BlockSpec((S, HW, Cin), lambda n: (n, 0, 0)),
            pl.BlockSpec((S, HW, Cout), lambda n: (n, 0, 0)),
            pl.BlockSpec((Cin, Cout), lambda n: (0, 0)),
            pl.BlockSpec((1, Cout), lambda n: (0, 0)),
            pl.BlockSpec((1, Cout), lambda n: (0, 0)),
            pl.BlockSpec((1, Cout), lambda n: (0, 0)),
        ],
        out_specs=pl.BlockSpec((S, HW, Cout), lambda n: (n, 0, 0)),
        compiler_params=pltpu.CompilerParams(
            dimension_semantics=("parallel",)),
    )(a_tok, s_tok, wt, b, bn_scale, bn_shift)

    out = out_tok.reshape(N, H, W, Cout)
    if not channels_last:
        out = out.transpose(0, 3, 1, 2)
    return out


def interactive_tail(attn_out, skip, params, channels_last=False):
    """attn_out: (N,Cin,H,W) skip: (N,Cout,H,W) -> (N,Cout,H,W) bf16."""
    return _interactive_tail_impl(attn_out, skip, params, channels_last)


# ----------------------------------------------------------------------------
# Pure-JAX references (for correctness check) — f32, highest precision.
# ----------------------------------------------------------------------------
def combine_block_ref(res, vit, p):
    x = jnp.concatenate([res, vit], axis=1)
    z = x * p["dw_w"][None, :, None, None] + p["dw_b"][None, :, None, None]
    z = jnp.einsum("nchw,dc->ndhw", z, p["pw_w"],
                   precision=lax.Precision.HIGHEST) + p["pw_b"][None, :, None, None]
    mean = jnp.mean(z, axis=(1, 2, 3), keepdims=True)
    var = jnp.mean((z - mean) ** 2, axis=(1, 2, 3), keepdims=True)
    zn = (z - mean) * lax.rsqrt(var + LN_EPS)
    return zn * p["ln_g"][None] + p["ln_b"][None]


def interactive_tail_ref(attn_out, skip, p):
    z = jnp.einsum("nchw,dc->ndhw", attn_out, p["w"],
                   precision=lax.Precision.HIGHEST) + p["b"][None, :, None, None]
    z = jax.nn.relu(skip + z)
    inv = lax.rsqrt(p["bn_v"] + BN_EPS)
    return ((z - p["bn_m"][None, :, None, None]) * inv[None, :, None, None]
            * p["bn_g"][None, :, None, None] + p["bn_b"][None, :, None, None])


# ----------------------------------------------------------------------------
if __name__ == "__main__":
    key = jax.random.PRNGKey(0)
    ks = iter(jax.random.split(key, 20))

    N = 2
    # Combine_block operates at the backbone tail: res 512ch, vit 256ch, 7x7.
    CX, CY, H, W = 512, 256, 7, 7
    C = CX + CY
    res = jax.random.normal(next(ks), (N, CX, H, W), jnp.float32)
    vit = jax.random.normal(next(ks), (N, CY, H, W), jnp.float32)

    combine_params = {
        "dw_w": jax.random.normal(next(ks), (C,), jnp.float32) * 0.5,
        "dw_b": jax.random.normal(next(ks), (C,), jnp.float32) * 0.1,
        "pw_w": jax.random.normal(next(ks), (C, C), jnp.float32) / jnp.sqrt(C),
        "pw_b": jax.random.normal(next(ks), (C,), jnp.float32) * 0.1,
        "ln_g": jnp.ones((C, H, W), jnp.float32),
        "ln_b": jnp.zeros((C, H, W), jnp.float32),
    }

    out = combine_block(res, vit, combine_params)
    out = jax.block_until_ready(out)
    ref = combine_block_ref(res, vit, combine_params)
    assert out.shape == (N, C, H, W)
    # bf16 MXU operands + bf16 output vs f32-HIGHEST reference.
    assert jnp.allclose(out.astype(jnp.float32), ref, rtol=2e-2, atol=3e-2), \
        "combine_block mismatch"

    # NHWC (channels_last) fast path: no wrapper transposes at all.
    out_cl = combine_block(res.transpose(0, 2, 3, 1), vit.transpose(0, 2, 3, 1),
                           combine_params, channels_last=True)
    out_cl = jax.block_until_ready(out_cl)
    assert jnp.allclose(out_cl.transpose(0, 3, 1, 2).astype(jnp.float32), ref,
                        rtol=2e-2, atol=3e-2), "combine_block NHWC mismatch"

    # Interactive_block tail: attn output 384ch @14x14, skip (res) 256ch @14x14.
    CIN, COUT, HI, WI = 384, 256, 14, 14
    attn_out = jax.random.normal(next(ks), (N, CIN, HI, WI), jnp.float32)
    skip = jax.random.normal(next(ks), (N, COUT, HI, WI), jnp.float32)

    inter_params = {
        "w": jax.random.normal(next(ks), (COUT, CIN), jnp.float32) / jnp.sqrt(CIN),
        "b": jax.random.normal(next(ks), (COUT,), jnp.float32) * 0.1,
        "bn_g": jnp.ones((COUT,), jnp.float32),
        "bn_b": jnp.zeros((COUT,), jnp.float32),
        "bn_m": jax.random.normal(next(ks), (COUT,), jnp.float32) * 0.1,
        "bn_v": jax.random.uniform(next(ks), (COUT,), jnp.float32, 0.5, 1.5),
    }

    out2 = interactive_tail(attn_out, skip, inter_params)
    out2 = jax.block_until_ready(out2)
    ref2 = interactive_tail_ref(attn_out, skip, inter_params)
    assert out2.shape == (N, COUT, HI, WI)
    assert jnp.allclose(out2.astype(jnp.float32), ref2, rtol=2e-2, atol=3e-2), \
        "interactive_tail mismatch"

    print("KERNEL_OK")
</pallas_src>

<mosaic_0001>
module attributes {stable_mosaic.version = 11 : i64} {
  func.func @combine_block_kernel(%arg0: i32, %arg1: memref<1x49x512xbf16, #tpu.memory_space<vmem>>, %arg2: memref<1x49x256xbf16, #tpu.memory_space<vmem>>, %arg3: memref<512x768xbf16, #tpu.memory_space<vmem>>, %arg4: memref<256x768xbf16, #tpu.memory_space<vmem>>, %arg5: memref<1x768xf32, #tpu.memory_space<vmem>>, %arg6: memref<49x768xf32, #tpu.memory_space<vmem>>, %arg7: memref<49x768xf32, #tpu.memory_space<vmem>>, %arg8: memref<1x49x768xbf16, #tpu.memory_space<vmem>>) attributes {dimension_semantics = [#tpu.dimension_semantics<parallel>], iteration_bounds = array<i64: 2>, scalar_prefetch = 0 : i64, scratch_operands = 0 : i64, tpu.core_type = #tpu.core_type<tc>, window_params = [{transform_indices = @transform_0, window_bounds = array<i64: 1, 49, 512>}, {transform_indices = @transform_1, window_bounds = array<i64: 1, 49, 256>}, {pipeline_mode = #tpu.pipeline_mode<synchronous>, transform_indices = @transform_2, window_bounds = array<i64: 512, 768>}, {pipeline_mode = #tpu.pipeline_mode<synchronous>, transform_indices = @transform_3, window_bounds = array<i64: 256, 768>}, {pipeline_mode = #tpu.pipeline_mode<synchronous>, transform_indices = @transform_4, window_bounds = array<i64: 1, 768>}, {pipeline_mode = #tpu.pipeline_mode<synchronous>, transform_indices = @transform_5, window_bounds = array<i64: 49, 768>}, {pipeline_mode = #tpu.pipeline_mode<synchronous>, transform_indices = @transform_6, window_bounds = array<i64: 49, 768>}, {transform_indices = @transform_7, window_bounds = array<i64: 1, 49, 768>}]} {
    %c0 = arith.constant 0 : index
    %c0_0 = arith.constant 0 : index
    %c0_1 = arith.constant 0 : index
    %0 = vector.load %arg1[%c0, %c0_0, %c0_1] : memref<1x49x512xbf16, #tpu.memory_space<vmem>>, vector<1x49x512xbf16>
    %1 = vector.shape_cast %0 : vector<1x49x512xbf16> to vector<49x512xbf16>
    %c0_2 = arith.constant 0 : index
    %c0_3 = arith.constant 0 : index
    %2 = vector.load %arg3[%c0_2, %c0_3] : memref<512x768xbf16, #tpu.memory_space<vmem>>, vector<512x768xbf16>
    %cst = arith.constant dense<0.000000e+00> : vector<49x768xf32>
    %3 = tpu.matmul %1, %2, %cst {dimension_numbers = #tpu.dot_dimension_numbers<[1], [0], [0], [1], [0, 0, 1, 1], [], []>} : vector<49x512xbf16>, vector<512x768xbf16>, vector<49x768xf32> -> vector<49x768xf32>
    %c0_4 = arith.constant 0 : index
    %c0_5 = arith.constant 0 : index
    %c0_6 = arith.constant 0 : index
    %4 = vector.load %arg2[%c0_4, %c0_5, %c0_6] : memref<1x49x256xbf16, #tpu.memory_space<vmem>>, vector<1x49x256xbf16>
    %5 = vector.shape_cast %4 : vector<1x49x256xbf16> to vector<49x256xbf16>
    %c0_7 = arith.constant 0 : index
    %c0_8 = arith.constant 0 : index
    %6 = vector.load %arg4[%c0_7, %c0_8] : memref<256x768xbf16, #tpu.memory_space<vmem>>, vector<256x768xbf16>
    %cst_9 = arith.constant dense<0.000000e+00> : vector<49x768xf32>
    %7 = tpu.matmul %5, %6, %cst_9 {dimension_numbers = #tpu.dot_dimension_numbers<[1], [0], [0], [1], [0, 0, 1, 1], [], []>} : vector<49x256xbf16>, vector<256x768xbf16>, vector<49x768xf32> -> vector<49x768xf32>
    %8 = arith.addf %3, %7 : vector<49x768xf32>
    %c0_10 = arith.constant 0 : index
    %c0_11 = arith.constant 0 : index
    %9 = vector.load %arg5[%c0_10, %c0_11] : memref<1x768xf32, #tpu.memory_space<vmem>>, vector<1x768xf32>
    %10 = vector.broadcast %9 : vector<1x768xf32> to vector<49x768xf32>
    %11 = arith.addf %8, %10 : vector<49x768xf32>
    %12 = vector.shape_cast %11 : vector<49x768xf32> to vector<1x49x768xf32>
    %cst_12 = arith.constant dense<0.000000e+00> : vector<1xf32>
    %13 = vector.multi_reduction <add>, %12, %cst_12 [1, 2] : vector<1x49x768xf32> to vector<1xf32>
    %14 = vector.shape_cast %13 : vector<1xf32> to vector<1x1x1xf32>
    %15 = vector.extract %14[0, 0, 0] : f32 from vector<1x1x1xf32>
    %cst_13 = arith.constant 2.65731287E-5 : f32
    %16 = arith.mulf %15, %cst_13 : f32
    %17 = vector.broadcast %16 : f32 to vector<49x768xf32>
    %18 = arith.subf %11, %17 : vector<49x768xf32>
    %19 = arith.mulf %18, %18 : vector<49x768xf32>
    %20 = vector.shape_cast %19 : vector<49x768xf32> to vector<1x49x768xf32>
    %cst_14 = arith.constant dense<0.000000e+00> : vector<1xf32>
    %21 = vector.multi_reduction <add>, %20, %cst_14 [1, 2] : vector<1x49x768xf32> to vector<1xf32>
    %22 = vector.shape_cast %21 : vector<1xf32> to vector<1x1x1xf32>
    %23 = vector.extract %22[0, 0, 0] : f32 from vector<1x1x1xf32>
    %cst_15 = arith.constant 2.65731287E-5 : f32
    %24 = arith.mulf %23, %cst_15 : f32
    %cst_16 = arith.constant 9.99999974E-6 : f32
    %25 = arith.addf %24, %cst_16 : f32
    %26 = math.rsqrt %25 : f32
    %27 = vector.broadcast %26 : f32 to vector<49x768xf32>
    %28 = arith.mulf %18, %27 : vector<49x768xf32>
    %c0_17 = arith.constant 0 : index
    %c0_18 = arith.constant 0 : index
    %29 = vector.load %arg6[%c0_17, %c0_18] : memref<49x768xf32, #tpu.memory_space<vmem>>, vector<49x768xf32>
    %30 = arith.mulf %28, %29 : vector<49x768xf32>
    %c0_19 = arith.constant 0 : index
    %c0_20 = arith.constant 0 : index
    %31 = vector.load %arg7[%c0_19, %c0_20] : memref<49x768xf32, #tpu.memory_space<vmem>>, vector<49x768xf32>
    %32 = arith.addf %30, %31 : vector<49x768xf32>
    %33 = arith.truncf %32 : vector<49x768xf32> to vector<49x768xbf16>
    %c0_21 = arith.constant 0 : index
    %c0_22 = arith.constant 0 : index
    %c0_23 = arith.constant 0 : index
    %34 = vector.load %arg8[%c0_21, %c0_22, %c0_23] : memref<1x49x768xbf16, #tpu.memory_space<vmem>>, vector<1x49x768xbf16>
    %35 = vector.shape_cast %34 : vector<1x49x768xbf16> to vector<49x768xbf16>
    %36 = vector.shape_cast %33 : vector<49x768xbf16> to vector<1x49x768xbf16>
    tpu.vector_store %arg8[%c0_21, %c0_22, %c0_23], %36 {strides = array<i32>} : memref<1x49x768xbf16, #tpu.memory_space<vmem>>, vector<1x49x768xbf16>,
    return
  }
  func.func @transform_0(%arg0: i32) -> (i32, i32, i32) {
    %c0_i32 = arith.constant 0 : i32
    %c0_i32_0 = arith.constant 0 : i32
    %c0_i32_1 = arith.constant 0 : i32
    return %arg0, %c0_i32, %c0_i32_0 : i32, i32, i32
  }
  func.func @transform_1(%arg0: i32) -> (i32, i32, i32) {
    %c0_i32 = arith.constant 0 : i32
    %c0_i32_0 = arith.constant 0 : i32
    %c0_i32_1 = arith.constant 0 : i32
    return %arg0, %c0_i32, %c0_i32_0 : i32, i32, i32
  }
  func.func @transform_2(%arg0: i32) -> (i32, i32) {
    %c0_i32 = arith.constant 0 : i32
    %c0_i32_0 = arith.constant 0 : i32
    %c0_i32_1 = arith.constant 0 : i32
    return %c0_i32, %c0_i32_0 : i32, i32
  }
  func.func @transform_3(%arg0: i32) -> (i32, i32) {
    %c0_i32 = arith.constant 0 : i32
    %c0_i32_0 = arith.constant 0 : i32
    %c0_i32_1 = arith.constant 0 : i32
    return %c0_i32, %c0_i32_0 : i32, i32
  }
  func.func @transform_4(%arg0: i32) -> (i32, i32) {
    %c0_i32 = arith.constant 0 : i32
    %c0_i32_0 = arith.constant 0 : i32
    %c0_i32_1 = arith.constant 0 : i32
    return %c0_i32, %c0_i32_0 : i32, i32
  }
  func.func @transform_5(%arg0: i32) -> (i32, i32) {
    %c0_i32 = arith.constant 0 : i32
    %c0_i32_0 = arith.constant 0 : i32
    %c0_i32_1 = arith.constant 0 : i32
    return %c0_i32, %c0_i32_0 : i32, i32
  }
  func.func @transform_6(%arg0: i32) -> (i32, i32) {
    %c0_i32 = arith.constant 0 : i32
    %c0_i32_0 = arith.constant 0 : i32
    %c0_i32_1 = arith.constant 0 : i32
    return %c0_i32, %c0_i32_0 : i32, i32
  }
  func.func @transform_7(%arg0: i32) -> (i32, i32, i32) {
    %c0_i32 = arith.constant 0 : i32
    %c0_i32_0 = arith.constant 0 : i32
    %c0_i32_1 = arith.constant 0 : i32
    return %arg0, %c0_i32, %c0_i32_0 : i32, i32, i32
  }
}

</mosaic_0001>

<llo_original>
// kernel: _combine_block_impl.1
$region0: #{_combine_block_impl.1}
  #allocation0 [shape = 'u32[]', space=smem, size = 0x4, offset = 0x4, fixed_abs, tag = 'smem constant byte address 0x4 - core index']
  #allocation1 [shape = 'u32[144,128]{1,0:T(1,128)}', space=vmem, size = 0x12000, scoped, tag = 'internal scratch']
  %s0 = inlined_call_operand.vmem [shape: bf16[2,49,512], index: 0, kind: input, shape index: {}]
  %s1 = inlined_call_operand.vmem [shape: bf16[2,49,256], index: 1, kind: input, shape index: {}]
  %s2 = inlined_call_operand.vmem [shape: bf16[512,768], index: 2, kind: input, shape index: {}]
  %s3 = inlined_call_operand.vmem [shape: bf16[256,768], index: 3, kind: input, shape index: {}]
  %s4 = inlined_call_operand.vmem [shape: f32[1,768], index: 4, kind: input, shape index: {}]
  %s5 = inlined_call_operand.vmem [shape: f32[49,768], index: 5, kind: input, shape index: {}]
  %s6 = inlined_call_operand.vmem [shape: f32[49,768], index: 6, kind: input, shape index: {}]
  %s7 = inlined_call_operand.vmem [shape: bf16[2,49,768], index: 7, kind: output, shape index: {}]
  %s8 = sld [smem:[#allocation0]]
  $region61: #{_combine_block_impl.1} parent=0
    _
  %s10 = ssub.s32 1, %s8
  %s11 = scalar_select 0, %s10, %s8
  loop: start=0, step=1, limit=4
  $region2: #{_combine_block_impl.1} parent=0 // loop_pre_header
    _
  $region3: #{_combine_block_impl.1} parent=0 // loop_header
    %s13 = sphi 0, %s17
    %p14 = scmp.ge.s32.totalorder %s13, 4
    %s23 = sphi 0, %s25
    %s26 = sphi 0, %s23
    %s27 = sphi 0, %s26
    %s43 = sphi 0, %s27
    %s49 = sphi 0, %s51
    %s52 = sphi 0, %s49
    %s53 = sphi 0, %s52
    %s69 = sphi 0, %s53
    %s73 = sphi 0, %s73
    %s75 = sphi 0, %s73
    %s76 = sphi 0, %s75
    %s90 = sphi 0, %s76
    %s94 = sphi 0, %s94
    %s96 = sphi 0, %s94
    %s97 = sphi 0, %s96
    %s111 = sphi 0, %s97
    %s115 = sphi 0, %s115
    %s117 = sphi 0, %s115
    %s118 = sphi 0, %s117
    %s132 = sphi 0, %s118
    %s136 = sphi 0, %s136
    %s138 = sphi 0, %s136
    %s139 = sphi 0, %s138
    %s153 = sphi 0, %s139
    %s157 = sphi 0, %s157
    %s159 = sphi 0, %s157
    %s160 = sphi 0, %s159
    %s174 = sphi 0, %s160
    %s180 = sphi 0, %s182
    %s183 = sphi 0, %s180
    %s184 = sphi 0, %s183
    %s200 = sphi 0, %s184
  $region4: #{_combine_block_impl.1} parent=0 // loop_header_branch
    %16 = sbr.rel (%p14) target = $region8
  $region5: #{_combine_block_impl.1} parent=0 // loop_body
    %s18 = ssub.s32 %s13, 1
    %s19 = ssub.s32 %s13, 2
    %s20 = sadd.s32 %s13, 1
    %s21 = ssub.s32 %s13, %s20
    %p22 = scmp.eq.s32.totalorder %s21, 0
    %s24 = sadd.s32 %s23, 1
    %s25 = scalar_select %p22, %s23, %s24
    %p28 = pneg %p22
    %p29 = scmp.eq.s32.totalorder %s13, 1
    %p30 = por %p28, %p29
    %p31 = scmp.ne.s32.totalorder %s23, %s26
    %p32 = scmp.eq.s32.totalorder %s13, 0
    %p33 = por %p31, %p32
    %p34 = scmp.ne.s32.totalorder %s23, %s26
    %p35 = scmp.eq.s32.totalorder %s18, 1
    %p36 = por %p34, %p35
    %p37 = scmp.ne.s32.totalorder %s26, %s27
    %p38 = scmp.eq.s32.totalorder %s18, 0
    %p39 = por %p37, %p38
    %p40 = scmp.ne.s32.totalorder %s26, %s27
    %p41 = scmp.eq.s32.totalorder %s19, 1
    %p42 = por %p40, %p41
    %p44 = scmp.ne.s32.totalorder %s27, %s43
    %p45 = scmp.eq.s32.totalorder %s19, 0
    %p46 = por %p44, %p45
    %s47 = ssub.s32 %s13, %s20
    %p48 = scmp.eq.s32.totalorder %s47, 0
    %s50 = sadd.s32 %s49, 1
    %s51 = scalar_select %p48, %s49, %s50
    %p54 = pneg %p48
    %p55 = scmp.eq.s32.totalorder %s13, 1
    %p56 = por %p54, %p55
    %p57 = scmp.ne.s32.totalorder %s49, %s52
    %p58 = scmp.eq.s32.totalorder %s13, 0
    %p59 = por %p57, %p58
    %p60 = scmp.ne.s32.totalorder %s49, %s52
    %p61 = scmp.eq.s32.totalorder %s18, 1
    %p62 = por %p60, %p61
    %p63 = scmp.ne.s32.totalorder %s52, %s53
    %p64 = scmp.eq.s32.totalorder %s18, 0
    %p65 = por %p63, %p64
    %p66 = scmp.ne.s32.totalorder %s52, %s53
    %p67 = scmp.eq.s32.totalorder %s19, 1
    %p68 = por %p66, %p67
    %p70 = scmp.ne.s32.totalorder %s53, %s69
    %p71 = scmp.eq.s32.totalorder %s19, 0
    %p72 = por %p70, %p71
    %s74 = sadd.s32 %s73, 1
    %p77 = scmp.eq.s32.totalorder %s13, 1
    %p78 = scmp.ne.s32.totalorder %s73, %s75
    %p79 = scmp.eq.s32.totalorder %s13, 0
    %p80 = por %p78, %p79
    %p81 = scmp.ne.s32.totalorder %s73, %s75
    %p82 = scmp.eq.s32.totalorder %s18, 1
    %p83 = por %p81, %p82
    %p84 = scmp.ne.s32.totalorder %s75, %s76
    %p85 = scmp.eq.s32.totalorder %s18, 0
    %p86 = por %p84, %p85
    %p87 = scmp.ne.s32.totalorder %s75, %s76
    %p88 = scmp.eq.s32.totalorder %s19, 1
    %p89 = por %p87, %p88
    %p91 = scmp.ne.s32.totalorder %s76, %s90
    %p92 = scmp.eq.s32.totalorder %s19, 0
    %p93 = por %p91, %p92
    %s95 = sadd.s32 %s94, 1
    %p98 = scmp.eq.s32.totalorder %s13, 1
    %p99 = scmp.ne.s32.totalorder %s94, %s96
    %p100 = scmp.eq.s32.totalorder %s13, 0
    %p101 = por %p99, %p100
    %p102 = scmp.ne.s32.totalorder %s94, %s96
    %p103 = scmp.eq.s32.totalorder %s18, 1
    %p104 = por %p102, %p103
    %p105 = scmp.ne.s32.totalorder %s96, %s97
    %p106 = scmp.eq.s32.totalorder %s18, 0
    %p107 = por %p105, %p106
    %p108 = scmp.ne.s32.totalorder %s96, %s97
    %p109 = scmp.eq.s32.totalorder %s19, 1
    %p110 = por %p108, %p109
    %p112 = scmp.ne.s32.totalorder %s97, %s111
    %p113 = scmp.eq.s32.totalorder %s19, 0
    %p114 = por %p112, %p113
    %s116 = sadd.s32 %s115, 1
    %p119 = scmp.eq.s32.totalorder %s13, 1
    %p120 = scmp.ne.s32.totalorder %s115, %s117
    %p121 = scmp.eq.s32.totalorder %s13, 0
    %p122 = por %p120, %p121
    %p123 = scmp.ne.s32.totalorder %s115, %s117
    %p124 = scmp.eq.s32.totalorder %s18, 1
    %p125 = por %p123, %p124
    %p126 = scmp.ne.s32.totalorder %s117, %s118
    %p127 = scmp.eq.s32.totalorder %s18, 0
    %p128 = por %p126, %p127
    %p129 = scmp.ne.s32.totalorder %s117, %s118
    %p130 = scmp.eq.s32.totalorder %s19, 1
    %p131 = por %p129, %p130
    %p133 = scmp.ne.s32.totalorder %s118, %s132
    %p134 = scmp.eq.s32.totalorder %s19, 0
    %p135 = por %p133, %p134
    %s137 = sadd.s32 %s136, 1
    %p140 = scmp.eq.s32.totalorder %s13, 1
    %p141 = scmp.ne.s32.totalorder %s136, %s138
    %p142 = scmp.eq.s32.totalorder %s13, 0
    %p143 = por %p141, %p142
    %p144 = scmp.ne.s32.totalorder %s136, %s138
    %p145 = scmp.eq.s32.totalorder %s18, 1
    %p146 = por %p144, %p145
    %p147 = scmp.ne.s32.totalorder %s138, %s139
    %p148 = scmp.eq.s32.totalorder %s18, 0
    %p149 = por %p147, %p148
    %p150 = scmp.ne.s32.totalorder %s138, %s139
    %p151 = scmp.eq.s32.totalorder %s19, 1
    %p152 = por %p150, %p151
    %p154 = scmp.ne.s32.totalorder %s139, %s153
    %p155 = scmp.eq.s32.totalorder %s19, 0
    %p156 = por %p154, %p155
    %s158 = sadd.s32 %s157, 1
    %p161 = scmp.eq.s32.totalorder %s13, 1
    %p162 = scmp.ne.s32.totalorder %s157, %s159
    %p163 = scmp.eq.s32.totalorder %s13, 0
    %p164 = por %p162, %p163
    %p165 = scmp.ne.s32.totalorder %s157, %s159
    %p166 = scmp.eq.s32.totalorder %s18, 1
    %p167 = por %p165, %p166
    %p168 = scmp.ne.s32.totalorder %s159, %s160
    %p169 = scmp.eq.s32.totalorder %s18, 0
    %p170 = por %p168, %p169
    %p171 = scmp.ne.s32.totalorder %s159, %s160
    %p172 = scmp.eq.s32.totalorder %s19, 1
    %p173 = por %p171, %p172
    %p175 = scmp.ne.s32.totalorder %s160, %s174
    %p176 = scmp.eq.s32.totalorder %s19, 0
    %p177 = por %p175, %p176
    %s178 = ssub.s32 %s13, %s20
    %p179 = scmp.eq.s32.totalorder %s178, 0
    %s181 = sadd.s32 %s180, 1
    %s182 = scalar_select %p179, %s180, %s181
    %p185 = pneg %p179
    %p186 = scmp.eq.s32.totalorder %s13, 1
    %p187 = por %p185, %p186
    %p188 = scmp.ne.s32.totalorder %s180, %s183
    %p189 = scmp.eq.s32.totalorder %s13, 0
    %p190 = por %p188, %p189
    %p191 = scmp.ne.s32.totalorder %s180, %s183
    %p192 = scmp.eq.s32.totalorder %s18, 1
    %p193 = por %p191, %p192
    %p194 = scmp.ne.s32.totalorder %s183, %s184
    %p195 = scmp.eq.s32.totalorder %s18, 0
    %p196 = por %p194, %p195
    %p197 = scmp.ne.s32.totalorder %s183, %s184
    %p198 = scmp.eq.s32.totalorder %s19, 1
    %p199 = por %p197, %p198
    %p201 = scmp.ne.s32.totalorder %s184, %s200
    %p202 = scmp.eq.s32.totalorder %s19, 0
    %p203 = por %p201, %p202
    %p204 = scmp.le.s32.totalorder 1, %s13
    %p205 = scmp.lt.s32.totalorder %s13, 3
    %p206 = pnand %p204, %p205
    %p207 = pneg %p206
    // Predicated region
    $region9: #{_combine_block_impl.1} parent=5 // pred_check
      _
    $region10: #{_combine_block_impl.1} parent=5 // pred_check_branch
      %209 = sbr.rel (%p206) target = $region12
    $region11: #{_combine_block_impl.1} parent=5 // pred_region
      %s210 = ssub.s32 %s13, 1
      // Predicated region
      $region13: #{_combine_block_impl.1} parent=11 // pred_check
        %p211 = pneg %p86
      $region14: #{_combine_block_impl.1} parent=11 // pred_check_branch
        %213 = sbr.rel (%p211) target = $region16
      $region15: #{_combine_block_impl.1} parent=11 // pred_region
        _
      $region16: #{_combine_block_impl.1} parent=11 // pred_fallthru
        _
      // Predicated region
      $region17: #{_combine_block_impl.1} parent=11 // pred_check
        %p214 = pneg %p107
      $region18: #{_combine_block_impl.1} parent=11 // pred_check_branch
        %216 = sbr.rel (%p214) target = $region20
      $region19: #{_combine_block_impl.1} parent=11 // pred_region
        _
      $region20: #{_combine_block_impl.1} parent=11 // pred_fallthru
        _
      // Predicated region
      $region21: #{_combine_block_impl.1} parent=11 // pred_check
        %p217 = pneg %p128
      $region22: #{_combine_block_impl.1} parent=11 // pred_check_branch
        %219 = sbr.rel (%p217) target = $region24
      $region23: #{_combine_block_impl.1} parent=11 // pred_region
        _
      $region24: #{_combine_block_impl.1} parent=11 // pred_fallthru
        _
      // Predicated region
      $region25: #{_combine_block_impl.1} parent=11 // pred_check
        %p220 = pneg %p149
      $region26: #{_combine_block_impl.1} parent=11 // pred_check_branch
        %222 = sbr.rel (%p220) target = $region28
      $region27: #{_combine_block_impl.1} parent=11 // pred_region
        _
      $region28: #{_combine_block_impl.1} parent=11 // pred_fallthru
        _
      // Predicated region
      $region29: #{_combine_block_impl.1} parent=11 // pred_check
        %p223 = pneg %p170
      $region30: #{_combine_block_impl.1} parent=11 // pred_check_branch
        %225 = sbr.rel (%p223) target = $region32
      $region31: #{_combine_block_impl.1} parent=11 // pred_region
        _
      $region32: #{_combine_block_impl.1} parent=11 // pred_fallthru
        _
    $region12: #{_combine_block_impl.1} parent=5 // pred_fallthru
      _
    %p226 = scmp.lt.s32.totalorder %s13, 2
    // Predicated region
    $region33: #{_combine_block_impl.1} parent=5 // pred_check
      %p227 = pneg %p226
    $region34: #{_combine_block_impl.1} parent=5 // pred_check_branch
      %229 = sbr.rel (%p227) target = $region36
    $region35: #{_combine_block_impl.1} parent=5 // pred_region
      // Predicated region
      $region37: #{_combine_block_impl.1} parent=35 // pred_check
        %p230 = pneg %p33
      $region38: #{_combine_block_impl.1} parent=35 // pred_check_branch
        %232 = sbr.rel (%p230) target = $region40
      $region39: #{_combine_block_impl.1} parent=35 // pred_region
        %p233 = scmp.lt.s32.totalorder %s13, 1
        %s234 = scalar_select %p233, %s13, 1
        %s235 = smul.addr %s234, 28
        %s236 = smul.addr %s235, 4
        %s237 = scalar_lea.vmem %s0, %s236
      $region40: #{_combine_block_impl.1} parent=35 // pred_fallthru
        _
      // Predicated region
      $region41: #{_combine_block_impl.1} parent=35 // pred_check
        %p238 = pneg %p59
      $region42: #{_combine_block_impl.1} parent=35 // pred_check_branch
        %240 = sbr.rel (%p238) target = $region44
      $region43: #{_combine_block_impl.1} parent=35 // pred_region
        %p241 = scmp.lt.s32.totalorder %s13, 1
        %s242 = scalar_select %p241, %s13, 1
        %s243 = smul.addr %s242, 14
        %s244 = smul.addr %s243, 4
        %s245 = scalar_lea.vmem %s1, %s244
      $region44: #{_combine_block_impl.1} parent=35 // pred_fallthru
        _
    $region36: #{_combine_block_impl.1} parent=5 // pred_fallthru
      _
    %p246 = scmp.le.s32.totalorder 1, %s13
    %p247 = scmp.lt.s32.totalorder %s13, 3
    %p248 = pnand %p246, %p247
    %p249 = pneg %p248
    // Predicated region
    $region45: #{_combine_block_impl.1} parent=5 // pred_check
      _
    $region46: #{_combine_block_impl.1} parent=5 // pred_check_branch
      %251 = sbr.rel (%p248) target = $region48
    $region47: #{_combine_block_impl.1} parent=5 // pred_region
      %s252 = ssub.s32 %s13, 1
      %p253 = scmp.lt.s32.totalorder %s18, 1
      %s254 = scalar_select %p253, %s18, 1
      %s255 = smul.addr %s254, 28
      %s256 = smul.addr %s255, 4
      %s257 = scalar_lea.vmem %s0, %s256
      %p258 = pneg %p39
      %p259 = pneg %p36
      %p260 = scmp.lt.s32.totalorder %s18, 1
      %s261 = scalar_select %p260, %s18, 1
      %s262 = smul.addr %s261, 14
      %s263 = smul.addr %s262, 4
      %s264 = scalar_lea.vmem %s1, %s263
      %p265 = pneg %p65
      %p266 = pneg %p62
      %p267 = pneg %p86
      %p268 = pneg %p83
      %p269 = pneg %p107
      %p270 = pneg %p104
      %p271 = pneg %p128
      %p272 = pneg %p125
      %p273 = pneg %p149
      %p274 = pneg %p146
      %p275 = pneg %p170
      %p276 = pneg %p167
      %p277 = pneg %p196
      %p278 = pneg %p193
      %p279 = scmp.lt.s32.totalorder %s18, 1
      %s280 = scalar_select %p279, %s18, 1
      %s281 = smul.addr %s280, 42
      %s282 = smul.addr %s281, 4
      %s283 = scalar_lea.vmem %s7, %s282
      %p284 = scmp.lt.s32.totalorder %s18, 1
      %s285 = scalar_select %p284, %s18, 1
      %s286 = smul.addr %s285, 28
      %s287 = smul.addr %s286, 4
      %s288 = scalar_lea.vmem %s0, %s287
      %p289 = scmp.lt.s32.totalorder %s18, 1
      %s290 = scalar_select %p289, %s18, 1
      %s291 = smul.addr %s290, 14
      %s292 = smul.addr %s291, 4
      %s293 = scalar_lea.vmem %s1, %s292
      %p294 = scmp.lt.s32.totalorder %s18, 1
      %s295 = scalar_select %p294, %s18, 1
      %s296 = smul.addr %s295, 42
      %s297 = smul.addr %s296, 4
      %s298 = scalar_lea.vmem %s7, %s297
      %v299 = vld [vmem:[%s288] sm:$0xff]
      %v300 = vld [vmem:[%s288 + $0x8] sm:$0xff]
      %v301 = vld [vmem:[%s288 + $0x10] sm:$0xff]
      %v302 = vld [vmem:[%s288 + $0x18] sm:$0xff]
      %v303 = vld [vmem:[%s288 + $0x20] sm:$0xff]
      %v304 = vld [vmem:[%s288 + $0x28] sm:$0xff]
      %v305 = vld [vmem:[%s288 + $0x30] sm:$0xff]
      %v306 = vld [vmem:[%s288 + $0x38] sm:$0xff]
      %v307 = vld [vmem:[%s288 + $0x40] sm:$0xff]
      %v308 = vld [vmem:[%s288 + $0x48] sm:$0xff]
      %v309 = vld [vmem:[%s288 + $0x50] sm:$0xff]
      %v310 = vld [vmem:[%s288 + $0x58] sm:$0xff]
      %v311 = vld [vmem:[%s288 + $0x60] sm:$0x11]
      %v312 = vld [vmem:[%s288 + $0x68] sm:$0x11]
      %v313 = vld [vmem:[%s2] sm:$0xff]
      %v314 = vld [vmem:[%s2 + $0x8] sm:$0xff]
      %v315 = vld [vmem:[%s2 + $0x10] sm:$0xff]
      %v316 = vld [vmem:[%s2 + $0x18] sm:$0xff]
      %v317 = vld [vmem:[%s2 + $0x20] sm:$0xff]
      %v318 = vld [vmem:[%s2 + $0x28] sm:$0xff]
      %v319 = vld [vmem:[%s2 + $0x30] sm:$0xff]
      %v320 = vld [vmem:[%s2 + $0x38] sm:$0xff]
      %v321 = vld [vmem:[%s2 + $0x40] sm:$0xff]
      %v322 = vld [vmem:[%s2 + $0x48] sm:$0xff]
      %v323 = vld [vmem:[%s2 + $0x50] sm:$0xff]
      %v324 = vld [vmem:[%s2 + $0x58] sm:$0xff]
      %v325 = vld [vmem:[%s2 + $0x60] sm:$0xff]
      %v326 = vld [vmem:[%s2 + $0x68] sm:$0xff]
      %v327 = vld [vmem:[%s2 + $0x70] sm:$0xff]
      %v328 = vld [vmem:[%s2 + $0x78] sm:$0xff]
      %v329 = vld [vmem:[%s2 + $0x80] sm:$0xff]
      %v330 = vld [vmem:[%s2 + $0x88] sm:$0xff]
      %v331 = vld [vmem:[%s2 + $0x90] sm:$0xff]
      %v332 = vld [vmem:[%s2 + $0x98] sm:$0xff]
      %v333 = vld [vmem:[%s2 + $0xa0] sm:$0xff]
      %v334 = vld [vmem:[%s2 + $0xa8] sm:$0xff]
      %v335 = vld [vmem:[%s2 + $0xb0] sm:$0xff]
      %v336 = vld [vmem:[%s2 + $0xb8] sm:$0xff]
      %v337 = vld [vmem:[%s2 + $0xc0] sm:$0xff]
      %v338 = vld [vmem:[%s2 + $0xc8] sm:$0xff]
      %v339 = vld [vmem:[%s2 + $0xd0] sm:$0xff]
      %v340 = vld [vmem:[%s2 + $0xd8] sm:$0xff]
      %v341 = vld [vmem:[%s2 + $0xe0] sm:$0xff]
      %v342 = vld [vmem:[%s2 + $0xe8] sm:$0xff]
      %v343 = vld [vmem:[%s2 + $0xf0] sm:$0xff]
      %v344 = vld [vmem:[%s2 + $0xf8] sm:$0xff]
      %v345 = vld [vmem:[%s2 + $0x100] sm:$0xff]
      %v346 = vld [vmem:[%s2 + $0x108] sm:$0xff]
      %v347 = vld [vmem:[%s2 + $0x110] sm:$0xff]
      %v348 = vld [vmem:[%s2 + $0x118] sm:$0xff]
      %v349 = vld [vmem:[%s2 + $0x120] sm:$0xff]
      %v350 = vld [vmem:[%s2 + $0x128] sm:$0xff]
      %v351 = vld [vmem:[%s2 + $0x130] sm:$0xff]
      %v352 = vld [vmem:[%s2 + $0x138] sm:$0xff]
      %v353 = vld [vmem:[%s2 + $0x140] sm:$0xff]
      %v354 = vld [vmem:[%s2 + $0x148] sm:$0xff]
      %v355 = vld [vmem:[%s2 + $0x150] sm:$0xff]
      %v356 = vld [vmem:[%s2 + $0x158] sm:$0xff]
      %v357 = vld [vmem:[%s2 + $0x160] sm:$0xff]
      %v358 = vld [vmem:[%s2 + $0x168] sm:$0xff]
      %v359 = vld [vmem:[%s2 + $0x170] sm:$0xff]
      %v360 = vld [vmem:[%s2 + $0x178] sm:$0xff]
      %v361 = vld [vmem:[%s2 + $0x180] sm:$0xff]
      %v362 = vld [vmem:[%s2 + $0x188] sm:$0xff]
      %v363 = vld [vmem:[%s2 + $0x190] sm:$0xff]
      %v364 = vld [vmem:[%s2 + $0x198] sm:$0xff]
      %v365 = vld [vmem:[%s2 + $0x1a0] sm:$0xff]
      %v366 = vld [vmem:[%s2 + $0x1a8] sm:$0xff]
      %v367 = vld [vmem:[%s2 + $0x1b0] sm:$0xff]
      %v368 = vld [vmem:[%s2 + $0x1b8] sm:$0xff]
      %v369 = vld [vmem:[%s2 + $0x1c0] sm:$0xff]
      %v370 = vld [vmem:[%s2 + $0x1c8] sm:$0xff]
      %v371 = vld [vmem:[%s2 + $0x1d0] sm:$0xff]
      %v372 = vld [vmem:[%s2 + $0x1d8] sm:$0xff]
      %v373 = vld [vmem:[%s2 + $0x1e0] sm:$0xff]
      %v374 = vld [vmem:[%s2 + $0x1e8] sm:$0xff]
      %v375 = vld [vmem:[%s2 + $0x1f0] sm:$0xff]
      %v376 = vld [vmem:[%s2 + $0x1f8] sm:$0xff]
      %v377 = vld [vmem:[%s2 + $0x200] sm:$0xff]
      %v378 = vld [vmem:[%s2 + $0x208] sm:$0xff]
      %v379 = vld [vmem:[%s2 + $0x210] sm:$0xff]
      %v380 = vld [vmem:[%s2 + $0x218] sm:$0xff]
      %v381 = vld [vmem:[%s2 + $0x220] sm:$0xff]
      %v382 = vld [vmem:[%s2 + $0x228] sm:$0xff]
      %v383 = vld [vmem:[%s2 + $0x230] sm:$0xff]
      %v384 = vld [vmem:[%s2 + $0x238] sm:$0xff]
      %v385 = vld [vmem:[%s2 + $0x240] sm:$0xff]
      %v386 = vld [vmem:[%s2 + $0x248] sm:$0xff]
      %v387 = vld [vmem:[%s2 + $0x250] sm:$0xff]
      %v388 = vld [vmem:[%s2 + $0x258] sm:$0xff]
      %v389 = vld [vmem:[%s2 + $0x260] sm:$0xff]
      %v390 = vld [vmem:[%s2 + $0x268] sm:$0xff]
      %v391 = vld [vmem:[%s2 + $0x270] sm:$0xff]
      %v392 = vld [vmem:[%s2 + $0x278] sm:$0xff]
      %v393 = vld [vmem:[%s2 + $0x280] sm:$0xff]
      %v394 = vld [vmem:[%s2 + $0x288] sm:$0xff]
      %v395 = vld [vmem:[%s2 + $0x290] sm:$0xff]
      %v396 = vld [vmem:[%s2 + $0x298] sm:$0xff]
      %v397 = vld [vmem:[%s2 + $0x2a0] sm:$0xff]
      %v398 = vld [vmem:[%s2 + $0x2a8] sm:$0xff]
      %v399 = vld [vmem:[%s2 + $0x2b0] sm:$0xff]
      %v400 = vld [vmem:[%s2 + $0x2b8] sm:$0xff]
      %v401 = vld [vmem:[%s2 + $0x2c0] sm:$0xff]
      %v402 = vld [vmem:[%s2 + $0x2c8] sm:$0xff]
      %v403 = vld [vmem:[%s2 + $0x2d0] sm:$0xff]
      %v404 = vld [vmem:[%s2 + $0x2d8] sm:$0xff]
      %v405 = vld [vmem:[%s2 + $0x2e0] sm:$0xff]
      %v406 = vld [vmem:[%s2 + $0x2e8] sm:$0xff]
      %v407 = vld [vmem:[%s2 + $0x2f0] sm:$0xff]
      %v408 = vld [vmem:[%s2 + $0x2f8] sm:$0xff]
      %v409 = vld [vmem:[%s2 + $0x300] sm:$0xff]
      %v410 = vld [vmem:[%s2 + $0x308] sm:$0xff]
      %v411 = vld [vmem:[%s2 + $0x310] sm:$0xff]
      %v412 = vld [vmem:[%s2 + $0x318] sm:$0xff]
      %v413 = vld [vmem:[%s2 + $0x320] sm:$0xff]
      %v414 = vld [vmem:[%s2 + $0x328] sm:$0xff]
      %v415 = vld [vmem:[%s2 + $0x330] sm:$0xff]
      %v416 = vld [vmem:[%s2 + $0x338] sm:$0xff]
      %v417 = vld [vmem:[%s2 + $0x340] sm:$0xff]
      %v418 = vld [vmem:[%s2 + $0x348] sm:$0xff]
      %v419 = vld [vmem:[%s2 + $0x350] sm:$0xff]
      %v420 = vld [vmem:[%s2 + $0x358] sm:$0xff]
      %v421 = vld [vmem:[%s2 + $0x360] sm:$0xff]
      %v422 = vld [vmem:[%s2 + $0x368] sm:$0xff]
      %v423 = vld [vmem:[%s2 + $0x370] sm:$0xff]
      %v424 = vld [vmem:[%s2 + $0x378] sm:$0xff]
      %v425 = vld [vmem:[%s2 + $0x380] sm:$0xff]
      %v426 = vld [vmem:[%s2 + $0x388] sm:$0xff]
      %v427 = vld [vmem:[%s2 + $0x390] sm:$0xff]
      %v428 = vld [vmem:[%s2 + $0x398] sm:$0xff]
      %v429 = vld [vmem:[%s2 + $0x3a0] sm:$0xff]
      %v430 = vld [vmem:[%s2 + $0x3a8] sm:$0xff]
      %v431 = vld [vmem:[%s2 + $0x3b0] sm:$0xff]
      %v432 = vld [vmem:[%s2 + $0x3b8] sm:$0xff]
      %v433 = vld [vmem:[%s2 + $0x3c0] sm:$0xff]
      %v434 = vld [vmem:[%s2 + $0x3c8] sm:$0xff]
      %v435 = vld [vmem:[%s2 + $0x3d0] sm:$0xff]
      %v436 = vld [vmem:[%s2 + $0x3d8] sm:$0xff]
      %v437 = vld [vmem:[%s2 + $0x3e0] sm:$0xff]
      %v438 = vld [vmem:[%s2 + $0x3e8] sm:$0xff]
      %v439 = vld [vmem:[%s2 + $0x3f0] sm:$0xff]
      %v440 = vld [vmem:[%s2 + $0x3f8] sm:$0xff]
      %v441 = vld [vmem:[%s2 + $0x400] sm:$0xff]
      %v442 = vld [vmem:[%s2 + $0x408] sm:$0xff]
      %v443 = vld [vmem:[%s2 + $0x410] sm:$0xff]
      %v444 = vld [vmem:[%s2 + $0x418] sm:$0xff]
      %v445 = vld [vmem:[%s2 + $0x420] sm:$0xff]
      %v446 = vld [vmem:[%s2 + $0x428] sm:$0xff]
      %v447 = vld [vmem:[%s2 + $0x430] sm:$0xff]
      %v448 = vld [vmem:[%s2 + $0x438] sm:$0xff]
      %v449 = vld [vmem:[%s2 + $0x440] sm:$0xff]
      %v450 = vld [vmem:[%s2 + $0x448] sm:$0xff]
      %v451 = vld [vmem:[%s2 + $0x450] sm:$0xff]
      %v452 = vld [vmem:[%s2 + $0x458] sm:$0xff]
      %v453 = vld [vmem:[%s2 + $0x460] sm:$0xff]
      %v454 = vld [vmem:[%s2 + $0x468] sm:$0xff]
      %v455 = vld [vmem:[%s2 + $0x470] sm:$0xff]
      %v456 = vld [vmem:[%s2 + $0x478] sm:$0xff]
      %v457 = vld [vmem:[%s2 + $0x480] sm:$0xff]
      %v458 = vld [vmem:[%s2 + $0x488] sm:$0xff]
      %v459 = vld [vmem:[%s2 + $0x490] sm:$0xff]
      %v460 = vld [vmem:[%s2 + $0x498] sm:$0xff]
      %v461 = vld [vmem:[%s2 + $0x4a0] sm:$0xff]
      %v462 = vld [vmem:[%s2 + $0x4a8] sm:$0xff]
      %v463 = vld [vmem:[%s2 + $0x4b0] sm:$0xff]
      %v464 = vld [vmem:[%s2 + $0x4b8] sm:$0xff]
      %v465 = vld [vmem:[%s2 + $0x4c0] sm:$0xff]
      %v466 = vld [vmem:[%s2 + $0x4c8] sm:$0xff]
      %v467 = vld [vmem:[%s2 + $0x4d0] sm:$0xff]
      %v468 = vld [vmem:[%s2 + $0x4d8] sm:$0xff]
      %v469 = vld [vmem:[%s2 + $0x4e0] sm:$0xff]
      %v470 = vld [vmem:[%s2 + $0x4e8] sm:$0xff]
      %v471 = vld [vmem:[%s2 + $0x4f0] sm:$0xff]
      %v472 = vld [vmem:[%s2 + $0x4f8] sm:$0xff]
      %v473 = vld [vmem:[%s2 + $0x500] sm:$0xff]
      %v474 = vld [vmem:[%s2 + $0x508] sm:$0xff]
      %v475 = vld [vmem:[%s2 + $0x510] sm:$0xff]
      %v476 = vld [vmem:[%s2 + $0x518] sm:$0xff]
      %v477 = vld [vmem:[%s2 + $0x520] sm:$0xff]
      %v478 = vld [vmem:[%s2 + $0x528] sm:$0xff]
      %v479 = vld [vmem:[%s2 + $0x530] sm:$0xff]
      %v480 = vld [vmem:[%s2 + $0x538] sm:$0xff]
      %v481 = vld [vmem:[%s2 + $0x540] sm:$0xff]
      %v482 = vld [vmem:[%s2 + $0x548] sm:$0xff]
      %v483 = vld [vmem:[%s2 + $0x550] sm:$0xff]
      %v484 = vld [vmem:[%s2 + $0x558] sm:$0xff]
      %v485 = vld [vmem:[%s2 + $0x560] sm:$0xff]
      %v486 = vld [vmem:[%s2 + $0x568] sm:$0xff]
      %v487 = vld [vmem:[%s2 + $0x570] sm:$0xff]
      %v488 = vld [vmem:[%s2 + $0x578] sm:$0xff]
      %v489 = vld [vmem:[%s2 + $0x580] sm:$0xff]
      %v490 = vld [vmem:[%s2 + $0x588] sm:$0xff]
      %v491 = vld [vmem:[%s2 + $0x590] sm:$0xff]
      %v492 = vld [vmem:[%s2 + $0x598] sm:$0xff]
      %v493 = vld [vmem:[%s2 + $0x5a0] sm:$0xff]
      %v494 = vld [vmem:[%s2 + $0x5a8] sm:$0xff]
      %v495 = vld [vmem:[%s2 + $0x5b0] sm:$0xff]
      %v496 = vld [vmem:[%s2 + $0x5b8] sm:$0xff]
      %v497 = vld [vmem:[%s2 + $0x5c0] sm:$0xff]
      %v498 = vld [vmem:[%s2 + $0x5c8] sm:$0xff]
      %v499 = vld [vmem:[%s2 + $0x5d0] sm:$0xff]
      %v500 = vld [vmem:[%s2 + $0x5d8] sm:$0xff]
      %v501 = vld [vmem:[%s2 + $0x5e0] sm:$0xff]
      %v502 = vld [vmem:[%s2 + $0x5e8] sm:$0xff]
      %v503 = vld [vmem:[%s2 + $0x5f0] sm:$0xff]
      %v504 = vld [vmem:[%s2 + $0x5f8] sm:$0xff]
      %v505 = vld [vmem:[%s293] sm:$0xff]
      %v506 = vld [vmem:[%s293 + $0x8] sm:$0xff]
      %v507 = vld [vmem:[%s293 + $0x10] sm:$0xff]
      %v508 = vld [vmem:[%s293 + $0x18] sm:$0xff]
      %v509 = vld [vmem:[%s293 + $0x20] sm:$0xff]
      %v510 = vld [vmem:[%s293 + $0x28] sm:$0xff]
      %v511 = vld [vmem:[%s293 + $0x30] sm:$0x11]
      %v512 = vld [vmem:[%s3] sm:$0xff]
      %v513 = vld [vmem:[%s3 + $0x8] sm:$0xff]
      %v514 = vld [vmem:[%s3 + $0x10] sm:$0xff]
      %v515 = vld [vmem:[%s3 + $0x18] sm:$0xff]
      %v516 = vld [vmem:[%s3 + $0x20] sm:$0xff]
      %v517 = vld [vmem:[%s3 + $0x28] sm:$0xff]
      %v518 = vld [vmem:[%s3 + $0x30] sm:$0xff]
      %v519 = vld [vmem:[%s3 + $0x38] sm:$0xff]
      %v520 = vld [vmem:[%s3 + $0x40] sm:$0xff]
      %v521 = vld [vmem:[%s3 + $0x48] sm:$0xff]
      %v522 = vld [vmem:[%s3 + $0x50] sm:$0xff]
      %v523 = vld [vmem:[%s3 + $0x58] sm:$0xff]
      %v524 = vld [vmem:[%s3 + $0x60] sm:$0xff]
      %v525 = vld [vmem:[%s3 + $0x68] sm:$0xff]
      %v526 = vld [vmem:[%s3 + $0x70] sm:$0xff]
      %v527 = vld [vmem:[%s3 + $0x78] sm:$0xff]
      %v528 = vld [vmem:[%s3 + $0x80] sm:$0xff]
      %v529 = vld [vmem:[%s3 + $0x88] sm:$0xff]
      %v530 = vld [vmem:[%s3 + $0x90] sm:$0xff]
      %v531 = vld [vmem:[%s3 + $0x98] sm:$0xff]
      %v532 = vld [vmem:[%s3 + $0xa0] sm:$0xff]
      %v533 = vld [vmem:[%s3 + $0xa8] sm:$0xff]
      %v534 = vld [vmem:[%s3 + $0xb0] sm:$0xff]
      %v535 = vld [vmem:[%s3 + $0xb8] sm:$0xff]
      %v536 = vld [vmem:[%s3 + $0xc0] sm:$0xff]
      %v537 = vld [vmem:[%s3 + $0xc8] sm:$0xff]
      %v538 = vld [vmem:[%s3 + $0xd0] sm:$0xff]
      %v539 = vld [vmem:[%s3 + $0xd8] sm:$0xff]
      %v540 = vld [vmem:[%s3 + $0xe0] sm:$0xff]
      %v541 = vld [vmem:[%s3 + $0xe8] sm:$0xff]
      %v542 = vld [vmem:[%s3 + $0xf0] sm:$0xff]
      %v543 = vld [vmem:[%s3 + $0xf8] sm:$0xff]
      %v544 = vld [vmem:[%s3 + $0x100] sm:$0xff]
      %v545 = vld [vmem:[%s3 + $0x108] sm:$0xff]
      %v546 = vld [vmem:[%s3 + $0x110] sm:$0xff]
      %v547 = vld [vmem:[%s3 + $0x118] sm:$0xff]
      %v548 = vld [vmem:[%s3 + $0x120] sm:$0xff]
      %v549 = vld [vmem:[%s3 + $0x128] sm:$0xff]
      %v550 = vld [vmem:[%s3 + $0x130] sm:$0xff]
      %v551 = vld [vmem:[%s3 + $0x138] sm:$0xff]
      %v552 = vld [vmem:[%s3 + $0x140] sm:$0xff]
      %v553 = vld [vmem:[%s3 + $0x148] sm:$0xff]
      %v554 = vld [vmem:[%s3 + $0x150] sm:$0xff]
      %v555 = vld [vmem:[%s3 + $0x158] sm:$0xff]
      %v556 = vld [vmem:[%s3 + $0x160] sm:$0xff]
      %v557 = vld [vmem:[%s3 + $0x168] sm:$0xff]
      %v558 = vld [vmem:[%s3 + $0x170] sm:$0xff]
      %v559 = vld [vmem:[%s3 + $0x178] sm:$0xff]
      %v560 = vld [vmem:[%s3 + $0x180] sm:$0xff]
      %v561 = vld [vmem:[%s3 + $0x188] sm:$0xff]
      %v562 = vld [vmem:[%s3 + $0x190] sm:$0xff]
      %v563 = vld [vmem:[%s3 + $0x198] sm:$0xff]
      %v564 = vld [vmem:[%s3 + $0x1a0] sm:$0xff]
      %v565 = vld [vmem:[%s3 + $0x1a8] sm:$0xff]
      %v566 = vld [vmem:[%s3 + $0x1b0] sm:$0xff]
      %v567 = vld [vmem:[%s3 + $0x1b8] sm:$0xff]
      %v568 = vld [vmem:[%s3 + $0x1c0] sm:$0xff]
      %v569 = vld [vmem:[%s3 + $0x1c8] sm:$0xff]
      %v570 = vld [vmem:[%s3 + $0x1d0] sm:$0xff]
      %v571 = vld [vmem:[%s3 + $0x1d8] sm:$0xff]
      %v572 = vld [vmem:[%s3 + $0x1e0] sm:$0xff]
      %v573 = vld [vmem:[%s3 + $0x1e8] sm:$0xff]
      %v574 = vld [vmem:[%s3 + $0x1f0] sm:$0xff]
      %v575 = vld [vmem:[%s3 + $0x1f8] sm:$0xff]
      %v576 = vld [vmem:[%s3 + $0x200] sm:$0xff]
      %v577 = vld [vmem:[%s3 + $0x208] sm:$0xff]
      %v578 = vld [vmem:[%s3 + $0x210] sm:$0xff]
      %v579 = vld [vmem:[%s3 + $0x218] sm:$0xff]
      %v580 = vld [vmem:[%s3 + $0x220] sm:$0xff]
      %v581 = vld [vmem:[%s3 + $0x228] sm:$0xff]
      %v582 = vld [vmem:[%s3 + $0x230] sm:$0xff]
      %v583 = vld [vmem:[%s3 + $0x238] sm:$0xff]
      %v584 = vld [vmem:[%s3 + $0x240] sm:$0xff]
      %v585 = vld [vmem:[%s3 + $0x248] sm:$0xff]
      %v586 = vld [vmem:[%s3 + $0x250] sm:$0xff]
      %v587 = vld [vmem:[%s3 + $0x258] sm:$0xff]
      %v588 = vld [vmem:[%s3 + $0x260] sm:$0xff]
      %v589 = vld [vmem:[%s3 + $0x268] sm:$0xff]
      %v590 = vld [vmem:[%s3 + $0x270] sm:$0xff]
      %v591 = vld [vmem:[%s3 + $0x278] sm:$0xff]
      %v592 = vld [vmem:[%s3 + $0x280] sm:$0xff]
      %v593 = vld [vmem:[%s3 + $0x288] sm:$0xff]
      %v594 = vld [vmem:[%s3 + $0x290] sm:$0xff]
      %v595 = vld [vmem:[%s3 + $0x298] sm:$0xff]
      %v596 = vld [vmem:[%s3 + $0x2a0] sm:$0xff]
      %v597 = vld [vmem:[%s3 + $0x2a8] sm:$0xff]
      %v598 = vld [vmem:[%s3 + $0x2b0] sm:$0xff]
      %v599 = vld [vmem:[%s3 + $0x2b8] sm:$0xff]
      %v600 = vld [vmem:[%s3 + $0x2c0] sm:$0xff]
      %v601 = vld [vmem:[%s3 + $0x2c8] sm:$0xff]
      %v602 = vld [vmem:[%s3 + $0x2d0] sm:$0xff]
      %v603 = vld [vmem:[%s3 + $0x2d8] sm:$0xff]
      %v604 = vld [vmem:[%s3 + $0x2e0] sm:$0xff]
      %v605 = vld [vmem:[%s3 + $0x2e8] sm:$0xff]
      %v606 = vld [vmem:[%s3 + $0x2f0] sm:$0xff]
      %v607 = vld [vmem:[%s3 + $0x2f8] sm:$0xff]
      %v615 = vunpack.c.l.b16 %v505
      %v616 = vunpack.c.h.b16 %v505
      %v617 = vunpack.c.l.b16 %v506
      %v618 = vunpack.c.h.b16 %v506
      %v619 = vunpack.c.l.b16 %v507
      %v620 = vunpack.c.h.b16 %v507
      %v621 = vunpack.c.l.b16 %v508
      %v622 = vunpack.c.h.b16 %v508
      %v623 = vunpack.c.l.b16 %v509
      %v624 = vunpack.c.h.b16 %v509
      %v625 = vunpack.c.l.b16 %v510
      %v626 = vunpack.c.h.b16 %v510
      %v627 = vunpack.c.l.b16 %v511
      %v628 = vunpack.c.h.b16 %v511
      %v629 = vpack.c.b16 %v617, %v615
      %v630 = vpack.c.b16 %v618, %v616
      %v631 = vpack.c.b16 %v621, %v619
      %v632 = vpack.c.b16 %v622, %v620
      %v633 = vpack.c.b16 %v625, %v623
      %v634 = vpack.c.b16 %v626, %v624
      %v635 = vpack.c.b16 %v627, %v627
      %v636 = vpack.c.b16 %v628, %v628
      %v741 = vunpack.c.l.b16 %v512
      %v742 = vunpack.c.h.b16 %v512
      %v743 = vunpack.c.l.b16 %v513
      %v744 = vunpack.c.h.b16 %v513
      %v745 = vunpack.c.l.b16 %v514
      %v746 = vunpack.c.h.b16 %v514
      %v747 = vunpack.c.l.b16 %v515
      %v748 = vunpack.c.h.b16 %v515
      %v749 = vunpack.c.l.b16 %v516
      %v750 = vunpack.c.h.b16 %v516
      %v751 = vunpack.c.l.b16 %v517
      %v752 = vunpack.c.h.b16 %v517
      %v753 = vunpack.c.l.b16 %v518
      %v754 = vunpack.c.h.b16 %v518
      %v755 = vunpack.c.l.b16 %v519
      %v756 = vunpack.c.h.b16 %v519
      %v757 = vunpack.c.l.b16 %v520
      %v758 = vunpack.c.h.b16 %v520
      %v759 = vunpack.c.l.b16 %v521
      %v760 = vunpack.c.h.b16 %v521
      %v761 = vunpack.c.l.b16 %v522
      %v762 = vunpack.c.h.b16 %v522
      %v763 = vunpack.c.l.b16 %v523
      %v764 = vunpack.c.h.b16 %v523
      %v765 = vunpack.c.l.b16 %v524
      %v766 = vunpack.c.h.b16 %v524
      %v767 = vunpack.c.l.b16 %v525
      %v768 = vunpack.c.h.b16 %v525
      %v769 = vunpack.c.l.b16 %v526
      %v770 = vunpack.c.h.b16 %v526
      %v771 = vunpack.c.l.b16 %v527
      %v772 = vunpack.c.h.b16 %v527
      %v773 = vunpack.c.l.b16 %v528
      %v774 = vunpack.c.h.b16 %v528
      %v775 = vunpack.c.l.b16 %v529
      %v776 = vunpack.c.h.b16 %v529
      %v777 = vunpack.c.l.b16 %v530
      %v778 = vunpack.c.h.b16 %v530
      %v779 = vunpack.c.l.b16 %v531
      %v780 = vunpack.c.h.b16 %v531
      %v781 = vunpack.c.l.b16 %v532
      %v782 = vunpack.c.h.b16 %v532
      %v783 = vunpack.c.l.b16 %v533
      %v784 = vunpack.c.h.b16 %v533
      %v785 = vunpack.c.l.b16 %v534
      %v786 = vunpack.c.h.b16 %v534
      %v787 = vunpack.c.l.b16 %v535
      %v788 = vunpack.c.h.b16 %v535
      %v789 = vunpack.c.l.b16 %v536
      %v790 = vunpack.c.h.b16 %v536
      %v791 = vunpack.c.l.b16 %v537
      %v792 = vunpack.c.h.b16 %v537
      %v793 = vunpack.c.l.b16 %v538
      %v794 = vunpack.c.h.b16 %v538
      %v795 = vunpack.c.l.b16 %v539
      %v796 = vunpack.c.h.b16 %v539
      %v797 = vunpack.c.l.b16 %v540
      %v798 = vunpack.c.h.b16 %v540
      %v799 = vunpack.c.l.b16 %v541
      %v800 = vunpack.c.h.b16 %v541
      %v801 = vunpack.c.l.b16 %v542
      %v802 = vunpack.c.h.b16 %v542
      %v803 = vunpack.c.l.b16 %v543
      %v804 = vunpack.c.h.b16 %v543
      %v805 = vunpack.c.l.b16 %v544
      %v806 = vunpack.c.h.b16 %v544
      %v807 = vunpack.c.l.b16 %v545
      %v808 = vunpack.c.h.b16 %v545
      %v809 = vunpack.c.l.b16 %v546
      %v810 = vunpack.c.h.b16 %v546
      %v811 = vunpack.c.l.b16 %v547
      %v812 = vunpack.c.h.b16 %v547
      %v813 = vunpack.c.l.b16 %v548
      %v814 = vunpack.c.h.b16 %v548
      %v815 = vunpack.c.l.b16 %v549
      %v816 = vunpack.c.h.b16 %v549
      %v817 = vunpack.c.l.b16 %v550
      %v818 = vunpack.c.h.b16 %v550
      %v819 = vunpack.c.l.b16 %v551
      %v820 = vunpack.c.h.b16 %v551
      %v821 = vunpack.c.l.b16 %v552
      %v822 = vunpack.c.h.b16 %v552
      %v823 = vunpack.c.l.b16 %v553
      %v824 = vunpack.c.h.b16 %v553
      %v825 = vunpack.c.l.b16 %v554
      %v826 = vunpack.c.h.b16 %v554
      %v827 = vunpack.c.l.b16 %v555
      %v828 = vunpack.c.h.b16 %v555
      %v829 = vunpack.c.l.b16 %v556
      %v830 = vunpack.c.h.b16 %v556
      %v831 = vunpack.c.l.b16 %v557
      %v832 = vunpack.c.h.b16 %v557
      %v833 = vunpack.c.l.b16 %v558
      %v834 = vunpack.c.h.b16 %v558
      %v835 = vunpack.c.l.b16 %v559
      %v836 = vunpack.c.h.b16 %v559
      %v837 = vunpack.c.l.b16 %v560
      %v838 = vunpack.c.h.b16 %v560
      %v839 = vunpack.c.l.b16 %v561
      %v840 = vunpack.c.h.b16 %v561
      %v841 = vunpack.c.l.b16 %v562
      %v842 = vunpack.c.h.b16 %v562
      %v843 = vunpack.c.l.b16 %v563
      %v844 = vunpack.c.h.b16 %v563
      %v845 = vunpack.c.l.b16 %v564
      %v846 = vunpack.c.h.b16 %v564
      %v847 = vunpack.c.l.b16 %v565
      %v848 = vunpack.c.h.b16 %v565
      %v849 = vunpack.c.l.b16 %v566
      %v850 = vunpack.c.h.b16 %v566
      %v851 = vunpack.c.l.b16 %v567
      %v852 = vunpack.c.h.b16 %v567
      %v853 = vunpack.c.l.b16 %v568
      %v854 = vunpack.c.h.b16 %v568
      %v855 = vunpack.c.l.b16 %v569
      %v856 = vunpack.c.h.b16 %v569
      %v857 = vunpack.c.l.b16 %v570
      %v858 = vunpack.c.h.b16 %v570
      %v859 = vunpack.c.l.b16 %v571
      %v860 = vunpack.c.h.b16 %v571
      %v861 = vunpack.c.l.b16 %v572
      %v862 = vunpack.c.h.b16 %v572
      %v863 = vunpack.c.l.b16 %v573
      %v864 = vunpack.c.h.b16 %v573
      %v865 = vunpack.c.l.b16 %v574
      %v866 = vunpack.c.h.b16 %v574
      %v867 = vunpack.c.l.b16 %v575
      %v868 = vunpack.c.h.b16 %v575
      %v869 = vunpack.c.l.b16 %v576
      %v870 = vunpack.c.h.b16 %v576
      %v871 = vunpack.c.l.b16 %v577
      %v872 = vunpack.c.h.b16 %v577
      %v873 = vunpack.c.l.b16 %v578
      %v874 = vunpack.c.h.b16 %v578
      %v875 = vunpack.c.l.b16 %v579
      %v876 = vunpack.c.h.b16 %v579
      %v877 = vunpack.c.l.b16 %v580
      %v878 = vunpack.c.h.b16 %v580
      %v879 = vunpack.c.l.b16 %v581
      %v880 = vunpack.c.h.b16 %v581
      %v881 = vunpack.c.l.b16 %v582
      %v882 = vunpack.c.h.b16 %v582
      %v883 = vunpack.c.l.b16 %v583
      %v884 = vunpack.c.h.b16 %v583
      %v885 = vunpack.c.l.b16 %v584
      %v886 = vunpack.c.h.b16 %v584
      %v887 = vunpack.c.l.b16 %v585
      %v888 = vunpack.c.h.b16 %v585
      %v889 = vunpack.c.l.b16 %v586
      %v890 = vunpack.c.h.b16 %v586
      %v891 = vunpack.c.l.b16 %v587
      %v892 = vunpack.c.h.b16 %v587
      %v893 = vunpack.c.l.b16 %v588
      %v894 = vunpack.c.h.b16 %v588
      %v895 = vunpack.c.l.b16 %v589
      %v896 = vunpack.c.h.b16 %v589
      %v897 = vunpack.c.l.b16 %v590
      %v898 = vunpack.c.h.b16 %v590
      %v899 = vunpack.c.l.b16 %v591
      %v900 = vunpack.c.h.b16 %v591
      %v901 = vunpack.c.l.b16 %v592
      %v902 = vunpack.c.h.b16 %v592
      %v903 = vunpack.c.l.b16 %v593
      %v904 = vunpack.c.h.b16 %v593
      %v905 = vunpack.c.l.b16 %v594
      %v906 = vunpack.c.h.b16 %v594
      %v907 = vunpack.c.l.b16 %v595
      %v908 = vunpack.c.h.b16 %v595
      %v909 = vunpack.c.l.b16 %v596
      %v910 = vunpack.c.h.b16 %v596
      %v911 = vunpack.c.l.b16 %v597
      %v912 = vunpack.c.h.b16 %v597
      %v913 = vunpack.c.l.b16 %v598
      %v914 = vunpack.c.h.b16 %v598
      %v915 = vunpack.c.l.b16 %v599
      %v916 = vunpack.c.h.b16 %v599
      %v917 = vunpack.c.l.b16 %v600
      %v918 = vunpack.c.h.b16 %v600
      %v919 = vunpack.c.l.b16 %v601
      %v920 = vunpack.c.h.b16 %v601
      %v921 = vunpack.c.l.b16 %v602
      %v922 = vunpack.c.h.b16 %v602
      %v923 = vunpack.c.l.b16 %v603
      %v924 = vunpack.c.h.b16 %v603
      %v925 = vunpack.c.l.b16 %v604
      %v926 = vunpack.c.h.b16 %v604
      %v927 = vunpack.c.l.b16 %v605
      %v928 = vunpack.c.h.b16 %v605
      %v929 = vunpack.c.l.b16 %v606
      %v930 = vunpack.c.h.b16 %v606
      %v931 = vunpack.c.l.b16 %v607
      %v932 = vunpack.c.h.b16 %v607
      %v933 = vpack.c.b16 %v747, %v741
      %v934 = vpack.c.b16 %v748, %v742
      %v935 = vpack.c.b16 %v749, %v743
      %v936 = vpack.c.b16 %v750, %v744
      %v937 = vpack.c.b16 %v751, %v745
      %v938 = vpack.c.b16 %v752, %v746
      %v939 = vpack.c.b16 %v759, %v753
      %v940 = vpack.c.b16 %v760, %v754
      %v941 = vpack.c.b16 %v761, %v755
      %v942 = vpack.c.b16 %v762, %v756
      %v943 = vpack.c.b16 %v763, %v757
      %v944 = vpack.c.b16 %v764, %v758
      %v945 = vpack.c.b16 %v771, %v765
      %v946 = vpack.c.b16 %v772, %v766
      %v947 = vpack.c.b16 %v773, %v767
      %v948 = vpack.c.b16 %v774, %v768
      %v949 = vpack.c.b16 %v775, %v769
      %v950 = vpack.c.b16 %v776, %v770
      %v951 = vpack.c.b16 %v783, %v777
      %v952 = vpack.c.b16 %v784, %v778
      %v953 = vpack.c.b16 %v785, %v779
      %v954 = vpack.c.b16 %v786, %v780
      %v955 = vpack.c.b16 %v787, %v781
      %v956 = vpack.c.b16 %v788, %v782
      %v957 = vpack.c.b16 %v795, %v789
      %v958 = vpack.c.b16 %v796, %v790
      %v959 = vpack.c.b16 %v797, %v791
      %v960 = vpack.c.b16 %v798, %v792
      %v961 = vpack.c.b16 %v799, %v793
      %v962 = vpack.c.b16 %v800, %v794
      %v963 = vpack.c.b16 %v807, %v801
      %v964 = vpack.c.b16 %v808, %v802
      %v965 = vpack.c.b16 %v809, %v803
      %v966 = vpack.c.b16 %v810, %v804
      %v967 = vpack.c.b16 %v811, %v805
      %v968 = vpack.c.b16 %v812, %v806
      %v969 = vpack.c.b16 %v819, %v813
      %v970 = vpack.c.b16 %v820, %v814
      %v971 = vpack.c.b16 %v821, %v815
      %v972 = vpack.c.b16 %v822, %v816
      %v973 = vpack.c.b16 %v823, %v817
      %v974 = vpack.c.b16 %v824, %v818
      %v975 = vpack.c.b16 %v831, %v825
      %v976 = vpack.c.b16 %v832, %v826
      %v977 = vpack.c.b16 %v833, %v827
      %v978 = vpack.c.b16 %v834, %v828
      %v979 = vpack.c.b16 %v835, %v829
      %v980 = vpack.c.b16 %v836, %v830
      %v981 = vpack.c.b16 %v843, %v837
      %v982 = vpack.c.b16 %v844, %v838
      %v983 = vpack.c.b16 %v845, %v839
      %v984 = vpack.c.b16 %v846, %v840
      %v985 = vpack.c.b16 %v847, %v841
      %v986 = vpack.c.b16 %v848, %v842
      %v987 = vpack.c.b16 %v855, %v849
      %v988 = vpack.c.b16 %v856, %v850
      %v989 = vpack.c.b16 %v857, %v851
      %v990 = vpack.c.b16 %v858, %v852
      %v991 = vpack.c.b16 %v859, %v853
      %v992 = vpack.c.b16 %v860, %v854
      %v993 = vpack.c.b16 %v867, %v861
      %v994 = vpack.c.b16 %v868, %v862
      %v995 = vpack.c.b16 %v869, %v863
      %v996 = vpack.c.b16 %v870, %v864
      %v997 = vpack.c.b16 %v871, %v865
      %v998 = vpack.c.b16 %v872, %v866
      %v999 = vpack.c.b16 %v879, %v873
      %v1000 = vpack.c.b16 %v880, %v874
      %v1001 = vpack.c.b16 %v881, %v875
      %v1002 = vpack.c.b16 %v882, %v876
      %v1003 = vpack.c.b16 %v883, %v877
      %v1004 = vpack.c.b16 %v884, %v878
      %v1005 = vpack.c.b16 %v891, %v885
      %v1006 = vpack.c.b16 %v892, %v886
      %v1007 = vpack.c.b16 %v893, %v887
      %v1008 = vpack.c.b16 %v894, %v888
      %v1009 = vpack.c.b16 %v895, %v889
      %v1010 = vpack.c.b16 %v896, %v890
      %v1011 = vpack.c.b16 %v903, %v897
      %v1012 = vpack.c.b16 %v904, %v898
      %v1013 = vpack.c.b16 %v905, %v899
      %v1014 = vpack.c.b16 %v906, %v900
      %v1015 = vpack.c.b16 %v907, %v901
      %v1016 = vpack.c.b16 %v908, %v902
      %v1017 = vpack.c.b16 %v915, %v909
      %v1018 = vpack.c.b16 %v916, %v910
      %v1019 = vpack.c.b16 %v917, %v911
      %v1020 = vpack.c.b16 %v918, %v912
      %v1021 = vpack.c.b16 %v919, %v913
      %v1022 = vpack.c.b16 %v920, %v914
      %v1023 = vpack.c.b16 %v927, %v921
      %v1024 = vpack.c.b16 %v928, %v922
      %v1025 = vpack.c.b16 %v929, %v923
      %v1026 = vpack.c.b16 %v930, %v924
      %v1027 = vpack.c.b16 %v931, %v925
      %v1028 = vpack.c.b16 %v932, %v926
      %1125 = vmatprep.subr.bf16.mxu0 %v976
      %1126 = vmatpush1.bf16.msra.mxu0 %v975
      %1127 = vmatprep.subr.bf16.mxu0 %v970
      %1128 = vmatpush1.bf16.msra.mxu0 %v969
      %1129 = vmatprep.subr.bf16.mxu0 %v964
      %1130 = vmatpush1.bf16.msra.mxu0 %v963
      %1131 = vmatprep.subr.bf16.mxu0 %v958
      %1132 = vmatpush1.bf16.msra.mxu0 %v957
      %1133 = vmatprep.subr.bf16.mxu0 %v952
      %1134 = vmatpush1.bf16.msra.mxu0 %v951
      %1135 = vmatprep.subr.bf16.mxu0 %v946
      %1136 = vmatpush1.bf16.msra.mxu0 %v945
      %1137 = vmatprep.subr.bf16.mxu0 %v940
      %1138 = vmatpush1.bf16.msra.mxu0 %v939
      %1139 = vmatprep.subr.bf16.mxu0 %v934
      %1140 = vmatpush1.bf16.msra.mxu0 %v933
      %1141 = vmatprep.subr.bf16.mxu0 %v1024
      %1142 = vmatpush2.bf16.msra.mxu0 %v1023
      %1143 = vmatprep.subr.bf16.mxu0 %v1018
      %1144 = vmatpush2.bf16.msra.mxu0 %v1017
      %1145 = vmatprep.subr.bf16.mxu0 %v1012
      %1146 = vmatpush2.bf16.msra.mxu0 %v1011
      %1147 = vmatprep.subr.bf16.mxu0 %v1006
      %1148 = vmatpush2.bf16.msra.mxu0 %v1005
      %1149 = vmatprep.subr.bf16.mxu0 %v1000
      %1150 = vmatpush2.bf16.msra.mxu0 %v999
      %1151 = vmatprep.subr.bf16.mxu0 %v994
      %1152 = vmatpush2.bf16.msra.mxu0 %v993
      %1153 = vmatprep.subr.bf16.mxu0 %v988
      %1154 = vmatpush2.bf16.msra.mxu0 %v987
      %1155 = vmatprep.subr.bf16.mxu0 %v982
      %1156 = vmatpush2.bf16.msra.mxu0 %v981
      %1157 = vmatprep.mubr.bf16.mxu0 %v630
      %1158 = vmatmul.mubr.bf16.gmra.mxu0 %v629
      %v1159 = vpop.f32.mrf.mxu0
      %v1160 = vadd.f32 0.0, %v1159
      %v1161 = vpop.f32.mrf.mxu0
      %v1162 = vadd.f32 0.0, %v1161
      %v1163 = vpop.f32.mrf.mxu0
      %v1164 = vadd.f32 0.0, %v1163
      %v1165 = vpop.f32.mrf.mxu0
      %v1166 = vadd.f32 0.0, %v1165
      %1167 = vmatprep.mubr.bf16.mxu0 %v632
      %1168 = vmatmul.mubr.bf16.gmra.mxu0 %v631
      %v1169 = vpop.f32.mrf.mxu0
      %v1170 = vadd.f32 0.0, %v1169
      %v1171 = vpop.f32.mrf.mxu0
      %v1172 = vadd.f32 0.0, %v1171
      %v1173 = vpop.f32.mrf.mxu0
      %v1174 = vadd.f32 0.0, %v1173
      %v1175 = vpop.f32.mrf.mxu0
      %v1176 = vadd.f32 0.0, %v1175
      %1177 = vmatprep.mubr.bf16.mxu0 %v634
      %1178 = vmatmul.mubr.bf16.gmra.mxu0 %v633
      %v1179 = vpop.f32.mrf.mxu0
      %v1180 = vadd.f32 0.0, %v1179
      %v1181 = vpop.f32.mrf.mxu0
      %v1182 = vadd.f32 0.0, %v1181
      %v1183 = vpop.f32.mrf.mxu0
      %v1184 = vadd.f32 0.0, %v1183
      %v1185 = vpop.f32.mrf.mxu0
      %v1186 = vadd.f32 0.0, %v1185
      %1187 = vmatprep.mubr.bf16.mxu0 %v636
      %1188 = vmatmul.mubr.bf16.gmra.mxu0 %v635
      %v1189 = vpop.f32.mrf.mxu0
      %v1190 = vadd.f32 0.0, %v1189
      %v1191 = vpop.f32.mrf.mxu0
      %v1192 = vadd.f32 0.0, %v1191
      %v1193 = vpop.f32.mrf.mxu0
      %v1194 = vpop.f32.mrf.mxu0
      %1195 = vdwg.mxu0
      %1196 = vmatprep.subr.bf16.mxu0 %v978
      %1197 = vmatpush1.bf16.msra.mxu0 %v977
      %1198 = vmatprep.subr.bf16.mxu0 %v972
      %1199 = vmatpush1.bf16.msra.mxu0 %v971
      %1200 = vmatprep.subr.bf16.mxu0 %v966
      %1201 = vmatpush1.bf16.msra.mxu0 %v965
      %1202 = vmatprep.subr.bf16.mxu0 %v960
      %1203 = vmatpush1.bf16.msra.mxu0 %v959
      %1204 = vmatprep.subr.bf16.mxu0 %v954
      %1205 = vmatpush1.bf16.msra.mxu0 %v953
      %1206 = vmatprep.subr.bf16.mxu0 %v948
      %1207 = vmatpush1.bf16.msra.mxu0 %v947
      %1208 = vmatprep.subr.bf16.mxu0 %v942
      %1209 = vmatpush1.bf16.msra.mxu0 %v941
      %1210 = vmatprep.subr.bf16.mxu0 %v936
      %1211 = vmatpush1.bf16.msra.mxu0 %v935
      %1212 = vmatprep.subr.bf16.mxu0 %v1026
      %1213 = vmatpush2.bf16.msra.mxu0 %v1025
      %1214 = vmatprep.subr.bf16.mxu0 %v1020
      %1215 = vmatpush2.bf16.msra.mxu0 %v1019
      %1216 = vmatprep.subr.bf16.mxu0 %v1014
      %1217 = vmatpush2.bf16.msra.mxu0 %v1013
      %1218 = vmatprep.subr.bf16.mxu0 %v1008
      %1219 = vmatpush2.bf16.msra.mxu0 %v1007
      %1220 = vmatprep.subr.bf16.mxu0 %v1002
      %1221 = vmatpush2.bf16.msra.mxu0 %v1001
      %1222 = vmatprep.subr.bf16.mxu0 %v996
      %1223 = vmatpush2.bf16.msra.mxu0 %v995
      %1224 = vmatprep.subr.bf16.mxu0 %v990
      %1225 = vmatpush2.bf16.msra.mxu0 %v989
      %1226 = vmatprep.subr.bf16.mxu0 %v984
      %1227 = vmatpush2.bf16.msra.mxu0 %v983
      %1228 = vmatprep.mubr.bf16.mxu0 %v630
      %1229 = vmatmul.mubr.bf16.gmra.mxu0 %v629
      %v1230 = vpop.f32.mrf.mxu0
      %v1231 = vadd.f32 0.0, %v1230
      %v1232 = vpop.f32.mrf.mxu0
      %v1233 = vadd.f32 0.0, %v1232
      %v1234 = vpop.f32.mrf.mxu0
      %v1235 = vadd.f32 0.0, %v1234
      %v1236 = vpop.f32.mrf.mxu0
      %v1237 = vadd.f32 0.0, %v1236
      %1238 = vmatprep.mubr.bf16.mxu0 %v632
      %1239 = vmatmul.mubr.bf16.gmra.mxu0 %v631
      %v1240 = vpop.f32.mrf.mxu0
      %v1241 = vadd.f32 0.0, %v1240
      %v1242 = vpop.f32.mrf.mxu0
      %v1243 = vadd.f32 0.0, %v1242
      %v1244 = vpop.f32.mrf.mxu0
      %v1245 = vadd.f32 0.0, %v1244
      %v1246 = vpop.f32.mrf.mxu0
      %v1247 = vadd.f32 0.0, %v1246
      %1248 = vmatprep.mubr.bf16.mxu0 %v634
      %1249 = vmatmul.mubr.bf16.gmra.mxu0 %v633
      %v1250 = vpop.f32.mrf.mxu0
      %v1251 = vadd.f32 0.0, %v1250
      %v1252 = vpop.f32.mrf.mxu0
      %v1253 = vadd.f32 0.0, %v1252
      %v1254 = vpop.f32.mrf.mxu0
      %v1255 = vadd.f32 0.0, %v1254
      %v1256 = vpop.f32.mrf.mxu0
      %v1257 = vadd.f32 0.0, %v1256
      %1258 = vmatprep.mubr.bf16.mxu0 %v636
      %1259 = vmatmul.mubr.bf16.gmra.mxu0 %v635
      %v1260 = vpop.f32.mrf.mxu0
      %v1261 = vadd.f32 0.0, %v1260
      %v1262 = vpop.f32.mrf.mxu0
      %v1263 = vadd.f32 0.0, %v1262
      %v1264 = vpop.f32.mrf.mxu0
      %v1265 = vpop.f32.mrf.mxu0
      %1266 = vdwg.mxu0
      %1267 = vmatprep.subr.bf16.mxu0 %v980
      %1268 = vmatpush1.bf16.msra.mxu0 %v979
      %1269 = vmatprep.subr.bf16.mxu0 %v974
      %1270 = vmatpush1.bf16.msra.mxu0 %v973
      %1271 = vmatprep.subr.bf16.mxu0 %v968
      %1272 = vmatpush1.bf16.msra.mxu0 %v967
      %1273 = vmatprep.subr.bf16.mxu0 %v962
      %1274 = vmatpush1.bf16.msra.mxu0 %v961
      %1275 = vmatprep.subr.bf16.mxu0 %v956
      %1276 = vmatpush1.bf16.msra.mxu0 %v955
      %1277 = vmatprep.subr.bf16.mxu0 %v950
      %1278 = vmatpush1.bf16.msra.mxu0 %v949
      %1279 = vmatprep.subr.bf16.mxu0 %v944
      %1280 = vmatpush1.bf16.msra.mxu0 %v943
      %1281 = vmatprep.subr.bf16.mxu0 %v938
      %1282 = vmatpush1.bf16.msra.mxu0 %v937
      %1283 = vmatprep.subr.bf16.mxu0 %v1028
      %1284 = vmatpush2.bf16.msra.mxu0 %v1027
      %1285 = vmatprep.subr.bf16.mxu0 %v1022
      %1286 = vmatpush2.bf16.msra.mxu0 %v1021
      %1287 = vmatprep.subr.bf16.mxu0 %v1016
      %1288 = vmatpush2.bf16.msra.mxu0 %v1015
      %1289 = vmatprep.subr.bf16.mxu0 %v1010
      %1290 = vmatpush2.bf16.msra.mxu0 %v1009
      %1291 = vmatprep.subr.bf16.mxu0 %v1004
      %1292 = vmatpush2.bf16.msra.mxu0 %v1003
      %1293 = vmatprep.subr.bf16.mxu0 %v998
      %1294 = vmatpush2.bf16.msra.mxu0 %v997
      %1295 = vmatprep.subr.bf16.mxu0 %v992
      %1296 = vmatpush2.bf16.msra.mxu0 %v991
      %1297 = vmatprep.subr.bf16.mxu0 %v986
      %1298 = vmatpush2.bf16.msra.mxu0 %v985
      %1299 = vmatprep.mubr.bf16.mxu0 %v630
      %1300 = vmatmul.mubr.bf16.gmra.mxu0 %v629
      %v1301 = vpop.f32.mrf.mxu0
      %v1302 = vadd.f32 0.0, %v1301
      %v1303 = vpop.f32.mrf.mxu0
      %v1304 = vadd.f32 0.0, %v1303
      %v1305 = vpop.f32.mrf.mxu0
      %v1306 = vadd.f32 0.0, %v1305
      %v1307 = vpop.f32.mrf.mxu0
      %v1308 = vadd.f32 0.0, %v1307
      %1309 = vmatprep.mubr.bf16.mxu0 %v632
      %1310 = vmatmul.mubr.bf16.gmra.mxu0 %v631
      %v1311 = vpop.f32.mrf.mxu0
      %v1312 = vadd.f32 0.0, %v1311
      %v1313 = vpop.f32.mrf.mxu0
      %v1314 = vadd.f32 0.0, %v1313
      %v1315 = vpop.f32.mrf.mxu0
      %v1316 = vadd.f32 0.0, %v1315
      %v1317 = vpop.f32.mrf.mxu0
      %v1318 = vadd.f32 0.0, %v1317
      %1319 = vmatprep.mubr.bf16.mxu0 %v634
      %1320 = vmatmul.mubr.bf16.gmra.mxu0 %v633
      %v1321 = vpop.f32.mrf.mxu0
      %v1322 = vadd.f32 0.0, %v1321
      %v1323 = vpop.f32.mrf.mxu0
      %v1324 = vadd.f32 0.0, %v1323
      %v1325 = vpop.f32.mrf.mxu0
      %v1326 = vadd.f32 0.0, %v1325
      %v1327 = vpop.f32.mrf.mxu0
      %v1328 = vadd.f32 0.0, %v1327
      %1329 = vmatprep.mubr.bf16.mxu0 %v636
      %1330 = vmatmul.mubr.bf16.gmra.mxu0 %v635
      %v1331 = vpop.f32.mrf.mxu0
      %v1332 = vadd.f32 0.0, %v1331
      %v1333 = vpop.f32.mrf.mxu0
      %v1334 = vadd.f32 0.0, %v1333
      %v1335 = vpop.f32.mrf.mxu0
      %v1336 = vpop.f32.mrf.mxu0
      %1337 = vdwg.mxu0
      %v1352 = vunpack.c.l.b16 %v299
      %v1353 = vunpack.c.h.b16 %v299
      %v1354 = vunpack.c.l.b16 %v300
      %v1355 = vunpack.c.h.b16 %v300
      %v1356 = vunpack.c.l.b16 %v301
      %v1357 = vunpack.c.h.b16 %v301
      %v1358 = vunpack.c.l.b16 %v302
      %v1359 = vunpack.c.h.b16 %v302
      %v1360 = vunpack.c.l.b16 %v303
      %v1361 = vunpack.c.h.b16 %v303
      %v1362 = vunpack.c.l.b16 %v304
      %v1363 = vunpack.c.h.b16 %v304
      %v1364 = vunpack.c.l.b16 %v305
      %v1365 = vunpack.c.h.b16 %v305
      %v1366 = vunpack.c.l.b16 %v306
      %v1367 = vunpack.c.h.b16 %v306
      %v1368 = vunpack.c.l.b16 %v307
      %v1369 = vunpack.c.h.b16 %v307
      %v1370 = vunpack.c.l.b16 %v308
      %v1371 = vunpack.c.h.b16 %v308
      %v1372 = vunpack.c.l.b16 %v309
      %v1373 = vunpack.c.h.b16 %v309
      %v1374 = vunpack.c.l.b16 %v310
      %v1375 = vunpack.c.h.b16 %v310
      %v1376 = vunpack.c.l.b16 %v311
      %v1377 = vunpack.c.h.b16 %v311
      %v1378 = vunpack.c.l.b16 %v312
      %v1379 = vunpack.c.h.b16 %v312
      %v1380 = vpack.c.b16 %v1356, %v1352
      %v1381 = vpack.c.b16 %v1357, %v1353
      %v1382 = vpack.c.b16 %v1358, %v1354
      %v1383 = vpack.c.b16 %v1359, %v1355
      %v1384 = vpack.c.b16 %v1364, %v1360
      %v1385 = vpack.c.b16 %v1365, %v1361
      %v1386 = vpack.c.b16 %v1366, %v1362
      %v1387 = vpack.c.b16 %v1367, %v1363
      %v1388 = vpack.c.b16 %v1372, %v1368
      %v1389 = vpack.c.b16 %v1373, %v1369
      %v1390 = vpack.c.b16 %v1374, %v1370
      %v1391 = vpack.c.b16 %v1375, %v1371
      %v1392 = vpack.c.b16 %v1376, %v1376
      %v1393 = vpack.c.b16 %v1377, %v1377
      %v1394 = vpack.c.b16 %v1378, %v1378
      %v1395 = vpack.c.b16 %v1379, %v1379
      %v1604 = vunpack.c.l.b16 %v313
      %v1605 = vunpack.c.h.b16 %v313
      %v1606 = vunpack.c.l.b16 %v314
      %v1607 = vunpack.c.h.b16 %v314
      %v1608 = vunpack.c.l.b16 %v315
      %v1609 = vunpack.c.h.b16 %v315
      %v1610 = vunpack.c.l.b16 %v316
      %v1611 = vunpack.c.h.b16 %v316
      %v1612 = vunpack.c.l.b16 %v317
      %v1613 = vunpack.c.h.b16 %v317
      %v1614 = vunpack.c.l.b16 %v318
      %v1615 = vunpack.c.h.b16 %v318
      %v1616 = vunpack.c.l.b16 %v319
      %v1617 = vunpack.c.h.b16 %v319
      %v1618 = vunpack.c.l.b16 %v320
      %v1619 = vunpack.c.h.b16 %v320
      %v1620 = vunpack.c.l.b16 %v321
      %v1621 = vunpack.c.h.b16 %v321
      %v1622 = vunpack.c.l.b16 %v322
      %v1623 = vunpack.c.h.b16 %v322
      %v1624 = vunpack.c.l.b16 %v323
      %v1625 = vunpack.c.h.b16 %v323
      %v1626 = vunpack.c.l.b16 %v324
      %v1627 = vunpack.c.h.b16 %v324
      %v1628 = vunpack.c.l.b16 %v325
      %v1629 = vunpack.c.h.b16 %v325
      %v1630 = vunpack.c.l.b16 %v326
      %v1631 = vunpack.c.h.b16 %v326
      %v1632 = vunpack.c.l.b16 %v327
      %v1633 = vunpack.c.h.b16 %v327
      %v1634 = vunpack.c.l.b16 %v328
      %v1635 = vunpack.c.h.b16 %v328
      %v1636 = vunpack.c.l.b16 %v329
      %v1637 = vunpack.c.h.b16 %v329
      %v1638 = vunpack.c.l.b16 %v330
      %v1639 = vunpack.c.h.b16 %v330
      %v1640 = vunpack.c.l.b16 %v331
      %v1641 = vunpack.c.h.b16 %v331
      %v1642 = vunpack.c.l.b16 %v332
      %v1643 = vunpack.c.h.b16 %v332
      %v1644 = vunpack.c.l.b16 %v333
      %v1645 = vunpack.c.h.b16 %v333
      %v1646 = vunpack.c.l.b16 %v334
      %v1647 = vunpack.c.h.b16 %v334
      %v1648 = vunpack.c.l.b16 %v335
      %v1649 = vunpack.c.h.b16 %v335
      %v1650 = vunpack.c.l.b16 %v336
      %v1651 = vunpack.c.h.b16 %v336
      %v1652 = vunpack.c.l.b16 %v337
      %v1653 = vunpack.c.h.b16 %v337
      %v1654 = vunpack.c.l.b16 %v338
      %v1655 = vunpack.c.h.b16 %v338
      %v1656 = vunpack.c.l.b16 %v339
      %v1657 = vunpack.c.h.b16 %v339
      %v1658 = vunpack.c.l.b16 %v340
      %v1659 = vunpack.c.h.b16 %v340
      %v1660 = vunpack.c.l.b16 %v341
      %v1661 = vunpack.c.h.b16 %v341
      %v1662 = vunpack.c.l.b16 %v342
      %v1663 = vunpack.c.h.b16 %v342
      %v1664 = vunpack.c.l.b16 %v343
      %v1665 = vunpack.c.h.b16 %v343
      %v1666 = vunpack.c.l.b16 %v344
      %v1667 = vunpack.c.h.b16 %v344
      %v1668 = vunpack.c.l.b16 %v345
      %v1669 = vunpack.c.h.b16 %v345
      %v1670 = vunpack.c.l.b16 %v346
      %v1671 = vunpack.c.h.b16 %v346
      %v1672 = vunpack.c.l.b16 %v347
      %v1673 = vunpack.c.h.b16 %v347
      %v1674 = vunpack.c.l.b16 %v348
      %v1675 = vunpack.c.h.b16 %v348
      %v1676 = vunpack.c.l.b16 %v349
      %v1677 = vunpack.c.h.b16 %v349
      %v1678 = vunpack.c.l.b16 %v350
      %v1679 = vunpack.c.h.b16 %v350
      %v1680 = vunpack.c.l.b16 %v351
      %v1681 = vunpack.c.h.b16 %v351
      %v1682 = vunpack.c.l.b16 %v352
      %v1683 = vunpack.c.h.b16 %v352
      %v1684 = vunpack.c.l.b16 %v353
      %v1685 = vunpack.c.h.b16 %v353
      %v1686 = vunpack.c.l.b16 %v354
      %v1687 = vunpack.c.h.b16 %v354
      %v1688 = vunpack.c.l.b16 %v355
      %v1689 = vunpack.c.h.b16 %v355
      %v1690 = vunpack.c.l.b16 %v356
      %v1691 = vunpack.c.h.b16 %v356
      %v1692 = vunpack.c.l.b16 %v357
      %v1693 = vunpack.c.h.b16 %v357
      %v1694 = vunpack.c.l.b16 %v358
      %v1695 = vunpack.c.h.b16 %v358
      %v1696 = vunpack.c.l.b16 %v359
      %v1697 = vunpack.c.h.b16 %v359
      %v1698 = vunpack.c.l.b16 %v360
      %v1699 = vunpack.c.h.b16 %v360
      %v1700 = vunpack.c.l.b16 %v361
      %v1701 = vunpack.c.h.b16 %v361
      %v1702 = vunpack.c.l.b16 %v362
      %v1703 = vunpack.c.h.b16 %v362
      %v1704 = vunpack.c.l.b16 %v363
      %v1705 = vunpack.c.h.b16 %v363
      %v1706 = vunpack.c.l.b16 %v364
      %v1707 = vunpack.c.h.b16 %v364
      %v1708 = vunpack.c.l.b16 %v365
      %v1709 = vunpack.c.h.b16 %v365
      %v1710 = vunpack.c.l.b16 %v366
      %v1711 = vunpack.c.h.b16 %v366
      %v1712 = vunpack.c.l.b16 %v367
      %v1713 = vunpack.c.h.b16 %v367
      %v1714 = vunpack.c.l.b16 %v368
      %v1715 = vunpack.c.h.b16 %v368
      %v1716 = vunpack.c.l.b16 %v369
      %v1717 = vunpack.c.h.b16 %v369
      %v1718 = vunpack.c.l.b16 %v370
      %v1719 = vunpack.c.h.b16 %v370
      %v1720 = vunpack.c.l.b16 %v371
      %v1721 = vunpack.c.h.b16 %v371
      %v1722 = vunpack.c.l.b16 %v372
      %v1723 = vunpack.c.h.b16 %v372
      %v1724 = vunpack.c.l.b16 %v373
      %v1725 = vunpack.c.h.b16 %v373
      %v1726 = vunpack.c.l.b16 %v374
      %v1727 = vunpack.c.h.b16 %v374
      %v1728 = vunpack.c.l.b16 %v375
      %v1729 = vunpack.c.h.b16 %v375
      %v1730 = vunpack.c.l.b16 %v376
      %v1731 = vunpack.c.h.b16 %v376
      %v1732 = vunpack.c.l.b16 %v377
      %v1733 = vunpack.c.h.b16 %v377
      %v1734 = vunpack.c.l.b16 %v378
      %v1735 = vunpack.c.h.b16 %v378
      %v1736 = vunpack.c.l.b16 %v379
      %v1737 = vunpack.c.h.b16 %v379
      %v1738 = vunpack.c.l.b16 %v380
      %v1739 = vunpack.c.h.b16 %v380
      %v1740 = vunpack.c.l.b16 %v381
      %v1741 = vunpack.c.h.b16 %v381
      %v1742 = vunpack.c.l.b16 %v382
      %v1743 = vunpack.c.h.b16 %v382
      %v1744 = vunpack.c.l.b16 %v383
      %v1745 = vunpack.c.h.b16 %v383
      %v1746 = vunpack.c.l.b16 %v384
      %v1747 = vunpack.c.h.b16 %v384
      %v1748 = vunpack.c.l.b16 %v385
      %v1749 = vunpack.c.h.b16 %v385
      %v1750 = vunpack.c.l.b16 %v386
      %v1751 = vunpack.c.h.b16 %v386
      %v1752 = vunpack.c.l.b16 %v387
      %v1753 = vunpack.c.h.b16 %v387
      %v1754 = vunpack.c.l.b16 %v388
      %v1755 = vunpack.c.h.b16 %v388
      %v1756 = vunpack.c.l.b16 %v389
      %v1757 = vunpack.c.h.b16 %v389
      %v1758 = vunpack.c.l.b16 %v390
      %v1759 = vunpack.c.h.b16 %v390
      %v1760 = vunpack.c.l.b16 %v391
      %v1761 = vunpack.c.h.b16 %v391
      %v1762 = vunpack.c.l.b16 %v392
      %v1763 = vunpack.c.h.b16 %v392
      %v1764 = vunpack.c.l.b16 %v393
      %v1765 = vunpack.c.h.b16 %v393
      %v1766 = vunpack.c.l.b16 %v394
      %v1767 = vunpack.c.h.b16 %v394
      %v1768 = vunpack.c.l.b16 %v395
      %v1769 = vunpack.c.h.b16 %v395
      %v1770 = vunpack.c.l.b16 %v396
      %v1771 = vunpack.c.h.b16 %v396
      %v1772 = vunpack.c.l.b16 %v397
      %v1773 = vunpack.c.h.b16 %v397
      %v1774 = vunpack.c.l.b16 %v398
      %v1775 = vunpack.c.h.b16 %v398
      %v1776 = vunpack.c.l.b16 %v399
      %v1777 = vunpack.c.h.b16 %v399
      %v1778 = vunpack.c.l.b16 %v400
      %v1779 = vunpack.c.h.b16 %v400
      %v1780 = vunpack.c.l.b16 %v401
      %v1781 = vunpack.c.h.b16 %v401
      %v1782 = vunpack.c.l.b16 %v402
      %v1783 = vunpack.c.h.b16 %v402
      %v1784 = vunpack.c.l.b16 %v403
      %v1785 = vunpack.c.h.b16 %v403
      %v1786 = vunpack.c.l.b16 %v404
      %v1787 = vunpack.c.h.b16 %v404
      %v1788 = vunpack.c.l.b16 %v405
      %v1789 = vunpack.c.h.b16 %v405
      %v1790 = vunpack.c.l.b16 %v406
      %v1791 = vunpack.c.h.b16 %v406
      %v1792 = vunpack.c.l.b16 %v407
      %v1793 = vunpack.c.h.b16 %v407
      %v1794 = vunpack.c.l.b16 %v408
      %v1795 = vunpack.c.h.b16 %v408
      %v1796 = vunpack.c.l.b16 %v409
      %v1797 = vunpack.c.h.b16 %v409
      %v1798 = vunpack.c.l.b16 %v410
      %v1799 = vunpack.c.h.b16 %v410
      %v1800 = vunpack.c.l.b16 %v411
      %v1801 = vunpack.c.h.b16 %v411
      %v1802 = vunpack.c.l.b16 %v412
      %v1803 = vunpack.c.h.b16 %v412
      %v1804 = vunpack.c.l.b16 %v413
      %v1805 = vunpack.c.h.b16 %v413
      %v1806 = vunpack.c.l.b16 %v414
      %v1807 = vunpack.c.h.b16 %v414
      %v1808 = vunpack.c.l.b16 %v415
      %v1809 = vunpack.c.h.b16 %v415
      %v1810 = vunpack.c.l.b16 %v416
      %v1811 = vunpack.c.h.b16 %v416
      %v1812 = vunpack.c.l.b16 %v417
      %v1813 = vunpack.c.h.b16 %v417
      %v1814 = vunpack.c.l.b16 %v418
      %v1815 = vunpack.c.h.b16 %v418
      %v1816 = vunpack.c.l.b16 %v419
      %v1817 = vunpack.c.h.b16 %v419
      %v1818 = vunpack.c.l.b16 %v420
      %v1819 = vunpack.c.h.b16 %v420
      %v1820 = vunpack.c.l.b16 %v421
      %v1821 = vunpack.c.h.b16 %v421
      %v1822 = vunpack.c.l.b16 %v422
      %v1823 = vunpack.c.h.b16 %v422
      %v1824 = vunpack.c.l.b16 %v423
      %v1825 = vunpack.c.h.b16 %v423
      %v1826 = vunpack.c.l.b16 %v424
      %v1827 = vunpack.c.h.b16 %v424
      %v1828 = vunpack.c.l.b16 %v425
      %v1829 = vunpack.c.h.b16 %v425
      %v1830 = vunpack.c.l.b16 %v426
      %v1831 = vunpack.c.h.b16 %v426
      %v1832 = vunpack.c.l.b16 %v427
      %v1833 = vunpack.c.h.b16 %v427
      %v1834 = vunpack.c.l.b16 %v428
      %v1835 = vunpack.c.h.b16 %v428
      %v1836 = vunpack.c.l.b16 %v429
      %v1837 = vunpack.c.h.b16 %v429
      %v1838 = vunpack.c.l.b16 %v430
      %v1839 = vunpack.c.h.b16 %v430
      %v1840 = vunpack.c.l.b16 %v431
      %v1841 = vunpack.c.h.b16 %v431
      %v1842 = vunpack.c.l.b16 %v432
      %v1843 = vunpack.c.h.b16 %v432
      %v1844 = vunpack.c.l.b16 %v433
      %v1845 = vunpack.c.h.b16 %v433
      %v1846 = vunpack.c.l.b16 %v434
      %v1847 = vunpack.c.h.b16 %v434
      %v1848 = vunpack.c.l.b16 %v435
      %v1849 = vunpack.c.h.b16 %v435
      %v1850 = vunpack.c.l.b16 %v436
      %v1851 = vunpack.c.h.b16 %v436
      %v1852 = vunpack.c.l.b16 %v437
      %v1853 = vunpack.c.h.b16 %v437
      %v1854 = vunpack.c.l.b16 %v438
      %v1855 = vunpack.c.h.b16 %v438
      %v1856 = vunpack.c.l.b16 %v439
      %v1857 = vunpack.c.h.b16 %v439
      %v1858 = vunpack.c.l.b16 %v440
      %v1859 = vunpack.c.h.b16 %v440
      %v1860 = vunpack.c.l.b16 %v441
      %v1861 = vunpack.c.h.b16 %v441
      %v1862 = vunpack.c.l.b16 %v442
      %v1863 = vunpack.c.h.b16 %v442
      %v1864 = vunpack.c.l.b16 %v443
      %v1865 = vunpack.c.h.b16 %v443
      %v1866 = vunpack.c.l.b16 %v444
      %v1867 = vunpack.c.h.b16 %v444
      %v1868 = vunpack.c.l.b16 %v445
      %v1869 = vunpack.c.h.b16 %v445
      %v1870 = vunpack.c.l.b16 %v446
      %v1871 = vunpack.c.h.b16 %v446
      %v1872 = vunpack.c.l.b16 %v447
      %v1873 = vunpack.c.h.b16 %v447
      %v1874 = vunpack.c.l.b16 %v448
      %v1875 = vunpack.c.h.b16 %v448
      %v1876 = vunpack.c.l.b16 %v449
      %v1877 = vunpack.c.h.b16 %v449
      %v1878 = vunpack.c.l.b16 %v450
      %v1879 = vunpack.c.h.b16 %v450
      %v1880 = vunpack.c.l.b16 %v451
      %v1881 = vunpack.c.h.b16 %v451
      %v1882 = vunpack.c.l.b16 %v452
      %v1883 = vunpack.c.h.b16 %v452
      %v1884 = vunpack.c.l.b16 %v453
      %v1885 = vunpack.c.h.b16 %v453
      %v1886 = vunpack.c.l.b16 %v454
      %v1887 = vunpack.c.h.b16 %v454
      %v1888 = vunpack.c.l.b16 %v455
      %v1889 = vunpack.c.h.b16 %v455
      %v1890 = vunpack.c.l.b16 %v456
      %v1891 = vunpack.c.h.b16 %v456
      %v1892 = vunpack.c.l.b16 %v457
      %v1893 = vunpack.c.h.b16 %v457
      %v1894 = vunpack.c.l.b16 %v458
      %v1895 = vunpack.c.h.b16 %v458
      %v1896 = vunpack.c.l.b16 %v459
      %v1897 = vunpack.c.h.b16 %v459
      %v1898 = vunpack.c.l.b16 %v460
      %v1899 = vunpack.c.h.b16 %v460
      %v1900 = vunpack.c.l.b16 %v461
      %v1901 = vunpack.c.h.b16 %v461
      %v1902 = vunpack.c.l.b16 %v462
      %v1903 = vunpack.c.h.b16 %v462
      %v1904 = vunpack.c.l.b16 %v463
      %v1905 = vunpack.c.h.b16 %v463
      %v1906 = vunpack.c.l.b16 %v464
      %v1907 = vunpack.c.h.b16 %v464
      %v1908 = vunpack.c.l.b16 %v465
      %v1909 = vunpack.c.h.b16 %v465
      %v1910 = vunpack.c.l.b16 %v466
      %v1911 = vunpack.c.h.b16 %v466
      %v1912 = vunpack.c.l.b16 %v467
      %v1913 = vunpack.c.h.b16 %v467
      %v1914 = vunpack.c.l.b16 %v468
      %v1915 = vunpack.c.h.b16 %v468
      %v1916 = vunpack.c.l.b16 %v469
      %v1917 = vunpack.c.h.b16 %v469
      %v1918 = vunpack.c.l.b16 %v470
      %v1919 = vunpack.c.h.b16 %v470
      %v1920 = vunpack.c.l.b16 %v471
      %v1921 = vunpack.c.h.b16 %v471
      %v1922 = vunpack.c.l.b16 %v472
      %v1923 = vunpack.c.h.b16 %v472
      %v1924 = vunpack.c.l.b16 %v473
      %v1925 = vunpack.c.h.b16 %v473
      %v1926 = vunpack.c.l.b16 %v474
      %v1927 = vunpack.c.h.b16 %v474
      %v1928 = vunpack.c.l.b16 %v475
      %v1929 = vunpack.c.h.b16 %v475
      %v1930 = vunpack.c.l.b16 %v476
      %v1931 = vunpack.c.h.b16 %v476
      %v1932 = vunpack.c.l.b16 %v477
      %v1933 = vunpack.c.h.b16 %v477
      %v1934 = vunpack.c.l.b16 %v478
      %v1935 = vunpack.c.h.b16 %v478
      %v1936 = vunpack.c.l.b16 %v479
      %v1937 = vunpack.c.h.b16 %v479
      %v1938 = vunpack.c.l.b16 %v480
      %v1939 = vunpack.c.h.b16 %v480
      %v1940 = vunpack.c.l.b16 %v481
      %v1941 = vunpack.c.h.b16 %v481
      %v1942 = vunpack.c.l.b16 %v482
      %v1943 = vunpack.c.h.b16 %v482
      %v1944 = vunpack.c.l.b16 %v483
      %v1945 = vunpack.c.h.b16 %v483
      %v1946 = vunpack.c.l.b16 %v484
      %v1947 = vunpack.c.h.b16 %v484
      %v1948 = vunpack.c.l.b16 %v485
      %v1949 = vunpack.c.h.b16 %v485
      %v1950 = vunpack.c.l.b16 %v486
      %v1951 = vunpack.c.h.b16 %v486
      %v1952 = vunpack.c.l.b16 %v487
      %v1953 = vunpack.c.h.b16 %v487
      %v1954 = vunpack.c.l.b16 %v488
      %v1955 = vunpack.c.h.b16 %v488
      %v1956 = vunpack.c.l.b16 %v489
      %v1957 = vunpack.c.h.b16 %v489
      %v1958 = vunpack.c.l.b16 %v490
      %v1959 = vunpack.c.h.b16 %v490
      %v1960 = vunpack.c.l.b16 %v491
      %v1961 = vunpack.c.h.b16 %v491
      %v1962 = vunpack.c.l.b16 %v492
      %v1963 = vunpack.c.h.b16 %v492
      %v1964 = vunpack.c.l.b16 %v493
      %v1965 = vunpack.c.h.b16 %v493
      %v1966 = vunpack.c.l.b16 %v494
      %v1967 = vunpack.c.h.b16 %v494
      %v1968 = vunpack.c.l.b16 %v495
      %v1969 = vunpack.c.h.b16 %v495
      %v1970 = vunpack.c.l.b16 %v496
      %v1971 = vunpack.c.h.b16 %v496
      %v1972 = vunpack.c.l.b16 %v497
      %v1973 = vunpack.c.h.b16 %v497
      %v1974 = vunpack.c.l.b16 %v498
      %v1975 = vunpack.c.h.b16 %v498
      %v1976 = vunpack.c.l.b16 %v499
      %v1977 = vunpack.c.h.b16 %v499
      %v1978 = vunpack.c.l.b16 %v500
      %v1979 = vunpack.c.h.b16 %v500
      %v1980 = vunpack.c.l.b16 %v501
      %v1981 = vunpack.c.h.b16 %v501
      %v1982 = vunpack.c.l.b16 %v502
      %v1983 = vunpack.c.h.b16 %v502
      %v1984 = vunpack.c.l.b16 %v503
      %v1985 = vunpack.c.h.b16 %v503
      %v1986 = vunpack.c.l.b16 %v504
      %v1987 = vunpack.c.h.b16 %v504
      %v1988 = vpack.c.b16 %v1610, %v1604
      %v1989 = vpack.c.b16 %v1611, %v1605
      %v1990 = vpack.c.b16 %v1612, %v1606
      %v1991 = vpack.c.b16 %v1613, %v1607
      %v1992 = vpack.c.b16 %v1614, %v1608
      %v1993 = vpack.c.b16 %v1615, %v1609
      %v1994 = vpack.c.b16 %v1622, %v1616
      %v1995 = vpack.c.b16 %v1623, %v1617
      %v1996 = vpack.c.b16 %v1624, %v1618
      %v1997 = vpack.c.b16 %v1625, %v1619
      %v1998 = vpack.c.b16 %v1626, %v1620
      %v1999 = vpack.c.b16 %v1627, %v1621
      %v2000 = vpack.c.b16 %v1634, %v1628
      %v2001 = vpack.c.b16 %v1635, %v1629
      %v2002 = vpack.c.b16 %v1636, %v1630
      %v2003 = vpack.c.b16 %v1637, %v1631
      %v2004 = vpack.c.b16 %v1638, %v1632
      %v2005 = vpack.c.b16 %v1639, %v1633
      %v2006 = vpack.c.b16 %v1646, %v1640
      %v2007 = vpack.c.b16 %v1647, %v1641
      %v2008 = vpack.c.b16 %v1648, %v1642
      %v2009 = vpack.c.b16 %v1649, %v1643
      %v2010 = vpack.c.b16 %v1650, %v1644
      %v2011 = vpack.c.b16 %v1651, %v1645
      %v2012 = vpack.c.b16 %v1658, %v1652
      %v2013 = vpack.c.b16 %v1659, %v1653
      %v2014 = vpack.c.b16 %v1660, %v1654
      %v2015 = vpack.c.b16 %v1661, %v1655
      %v2016 = vpack.c.b16 %v1662, %v1656
      %v2017 = vpack.c.b16 %v1663, %v1657
      %v2018 = vpack.c.b16 %v1670, %v1664
      %v2019 = vpack.c.b16 %v1671, %v1665
      %v2020 = vpack.c.b16 %v1672, %v1666
      %v2021 = vpack.c.b16 %v1673, %v1667
      %v2022 = vpack.c.b16 %v1674, %v1668
      %v2023 = vpack.c.b16 %v1675, %v1669
      %v2024 = vpack.c.b16 %v1682, %v1676
      %v2025 = vpack.c.b16 %v1683, %v1677
      %v2026 = vpack.c.b16 %v1684, %v1678
      %v2027 = vpack.c.b16 %v1685, %v1679
      %v2028 = vpack.c.b16 %v1686, %v1680
      %v2029 = vpack.c.b16 %v1687, %v1681
      %v2030 = vpack.c.b16 %v1694, %v1688
      %v2031 = vpack.c.b16 %v1695, %v1689
      %v2032 = vpack.c.b16 %v1696, %v1690
      %v2033 = vpack.c.b16 %v1697, %v1691
      %v2034 = vpack.c.b16 %v1698, %v1692
      %v2035 = vpack.c.b16 %v1699, %v1693
      %v2036 = vpack.c.b16 %v1706, %v1700
      %v2037 = vpack.c.b16 %v1707, %v1701
      %v2038 = vpack.c.b16 %v1708, %v1702
      %v2039 = vpack.c.b16 %v1709, %v1703
      %v2040 = vpack.c.b16 %v1710, %v1704
      %v2041 = vpack.c.b16 %v1711, %v1705
      %v2042 = vpack.c.b16 %v1718, %v1712
      %v2043 = vpack.c.b16 %v1719, %v1713
      %v2044 = vpack.c.b16 %v1720, %v1714
      %v2045 = vpack.c.b16 %v1721, %v1715
      %v2046 = vpack.c.b16 %v1722, %v1716
      %v2047 = vpack.c.b16 %v1723, %v1717
      %v2048 = vpack.c.b16 %v1730, %v1724
      %v2049 = vpack.c.b16 %v1731, %v1725
      %v2050 = vpack.c.b16 %v1732, %v1726
      %v2051 = vpack.c.b16 %v1733, %v1727
      %v2052 = vpack.c.b16 %v1734, %v1728
      %v2053 = vpack.c.b16 %v1735, %v1729
      %v2054 = vpack.c.b16 %v1742, %v1736
      %v2055 = vpack.c.b16 %v1743, %v1737
      %v2056 = vpack.c.b16 %v1744, %v1738
      %v2057 = vpack.c.b16 %v1745, %v1739
      %v2058 = vpack.c.b16 %v1746, %v1740
      %v2059 = vpack.c.b16 %v1747, %v1741
      %v2060 = vpack.c.b16 %v1754, %v1748
      %v2061 = vpack.c.b16 %v1755, %v1749
      %v2062 = vpack.c.b16 %v1756, %v1750
      %v2063 = vpack.c.b16 %v1757, %v1751
      %v2064 = vpack.c.b16 %v1758, %v1752
      %v2065 = vpack.c.b16 %v1759, %v1753
      %v2066 = vpack.c.b16 %v1766, %v1760
      %v2067 = vpack.c.b16 %v1767, %v1761
      %v2068 = vpack.c.b16 %v1768, %v1762
      %v2069 = vpack.c.b16 %v1769, %v1763
      %v2070 = vpack.c.b16 %v1770, %v1764
      %v2071 = vpack.c.b16 %v1771, %v1765
      %v2072 = vpack.c.b16 %v1778, %v1772
      %v2073 = vpack.c.b16 %v1779, %v1773
      %v2074 = vpack.c.b16 %v1780, %v1774
      %v2075 = vpack.c.b16 %v1781, %v1775
      %v2076 = vpack.c.b16 %v1782, %v1776
      %v2077 = vpack.c.b16 %v1783, %v1777
      %v2078 = vpack.c.b16 %v1790, %v1784
      %v2079 = vpack.c.b16 %v1791, %v1785
      %v2080 = vpack.c.b16 %v1792, %v1786
      %v2081 = vpack.c.b16 %v1793, %v1787
      %v2082 = vpack.c.b16 %v1794, %v1788
      %v2083 = vpack.c.b16 %v1795, %v1789
      %v2084 = vpack.c.b16 %v1802, %v1796
      %v2085 = vpack.c.b16 %v1803, %v1797
      %v2086 = vpack.c.b16 %v1804, %v1798
      %v2087 = vpack.c.b16 %v1805, %v1799
      %v2088 = vpack.c.b16 %v1806, %v1800
      %v2089 = vpack.c.b16 %v1807, %v1801
      %v2090 = vpack.c.b16 %v1814, %v1808
      %v2091 = vpack.c.b16 %v1815, %v1809
      %v2092 = vpack.c.b16 %v1816, %v1810
      %v2093 = vpack.c.b16 %v1817, %v1811
      %v2094 = vpack.c.b16 %v1818, %v1812
      %v2095 = vpack.c.b16 %v1819, %v1813
      %v2096 = vpack.c.b16 %v1826, %v1820
      %v2097 = vpack.c.b16 %v1827, %v1821
      %v2098 = vpack.c.b16 %v1828, %v1822
      %v2099 = vpack.c.b16 %v1829, %v1823
      %v2100 = vpack.c.b16 %v1830, %v1824
      %v2101 = vpack.c.b16 %v1831, %v1825
      %v2102 = vpack.c.b16 %v1838, %v1832
      %v2103 = vpack.c.b16 %v1839, %v1833
      %v2104 = vpack.c.b16 %v1840, %v1834
      %v2105 = vpack.c.b16 %v1841, %v1835
      %v2106 = vpack.c.b16 %v1842, %v1836
      %v2107 = vpack.c.b16 %v1843, %v1837
      %v2108 = vpack.c.b16 %v1850, %v1844
      %v2109 = vpack.c.b16 %v1851, %v1845
      %v2110 = vpack.c.b16 %v1852, %v1846
      %v2111 = vpack.c.b16 %v1853, %v1847
      %v2112 = vpack.c.b16 %v1854, %v1848
      %v2113 = vpack.c.b16 %v1855, %v1849
      %v2114 = vpack.c.b16 %v1862, %v1856
      %v2115 = vpack.c.b16 %v1863, %v1857
      %v2116 = vpack.c.b16 %v1864, %v1858
      %v2117 = vpack.c.b16 %v1865, %v1859
      %v2118 = vpack.c.b16 %v1866, %v1860
      %v2119 = vpack.c.b16 %v1867, %v1861
      %v2120 = vpack.c.b16 %v1874, %v1868
      %v2121 = vpack.c.b16 %v1875, %v1869
      %v2122 = vpack.c.b16 %v1876, %v1870
      %v2123 = vpack.c.b16 %v1877, %v1871
      %v2124 = vpack.c.b16 %v1878, %v1872
      %v2125 = vpack.c.b16 %v1879, %v1873
      %v2126 = vpack.c.b16 %v1886, %v1880
      %v2127 = vpack.c.b16 %v1887, %v1881
      %v2128 = vpack.c.b16 %v1888, %v1882
      %v2129 = vpack.c.b16 %v1889, %v1883
      %v2130 = vpack.c.b16 %v1890, %v1884
      %v2131 = vpack.c.b16 %v1891, %v1885
      %v2132 = vpack.c.b16 %v1898, %v1892
      %v2133 = vpack.c.b16 %v1899, %v1893
      %v2134 = vpack.c.b16 %v1900, %v1894
      %v2135 = vpack.c.b16 %v1901, %v1895
      %v2136 = vpack.c.b16 %v1902, %v1896
      %v2137 = vpack.c.b16 %v1903, %v1897
      %v2138 = vpack.c.b16 %v1910, %v1904
      %v2139 = vpack.c.b16 %v1911, %v1905
      %v2140 = vpack.c.b16 %v1912, %v1906
      %v2141 = vpack.c.b16 %v1913, %v1907
      %v2142 = vpack.c.b16 %v1914, %v1908
      %v2143 = vpack.c.b16 %v1915, %v1909
      %v2144 = vpack.c.b16 %v1922, %v1916
      %v2145 = vpack.c.b16 %v1923, %v1917
      %v2146 = vpack.c.b16 %v1924, %v1918
      %v2147 = vpack.c.b16 %v1925, %v1919
      %v2148 = vpack.c.b16 %v1926, %v1920
      %v2149 = vpack.c.b16 %v1927, %v1921
      %v2150 = vpack.c.b16 %v1934, %v1928
      %v2151 = vpack.c.b16 %v1935, %v1929
      %v2152 = vpack.c.b16 %v1936, %v1930
      %v2153 = vpack.c.b16 %v1937, %v1931
      %v2154 = vpack.c.b16 %v1938, %v1932
      %v2155 = vpack.c.b16 %v1939, %v1933
      %v2156 = vpack.c.b16 %v1946, %v1940
      %v2157 = vpack.c.b16 %v1947, %v1941
      %v2158 = vpack.c.b16 %v1948, %v1942
      %v2159 = vpack.c.b16 %v1949, %v1943
      %v2160 = vpack.c.b16 %v1950, %v1944
      %v2161 = vpack.c.b16 %v1951, %v1945
      %v2162 = vpack.c.b16 %v1958, %v1952
      %v2163 = vpack.c.b16 %v1959, %v1953
      %v2164 = vpack.c.b16 %v1960, %v1954
      %v2165 = vpack.c.b16 %v1961, %v1955
      %v2166 = vpack.c.b16 %v1962, %v1956
      %v2167 = vpack.c.b16 %v1963, %v1957
      %v2168 = vpack.c.b16 %v1970, %v1964
      %v2169 = vpack.c.b16 %v1971, %v1965
      %v2170 = vpack.c.b16 %v1972, %v1966
      %v2171 = vpack.c.b16 %v1973, %v1967
      %v2172 = vpack.c.b16 %v1974, %v1968
      %v2173 = vpack.c.b16 %v1975, %v1969
      %v2174 = vpack.c.b16 %v1982, %v1976
      %v2175 = vpack.c.b16 %v1983, %v1977
      %v2176 = vpack.c.b16 %v1984, %v1978
      %v2177 = vpack.c.b16 %v1985, %v1979
      %v2178 = vpack.c.b16 %v1986, %v1980
      %v2179 = vpack.c.b16 %v1987, %v1981
      %2372 = vmatprep.subr.bf16.mxu0 %v2031
      %2373 = vmatpush1.bf16.msra.mxu0 %v2030
      %2374 = vmatprep.subr.bf16.mxu0 %v2025
      %2375 = vmatpush1.bf16.msra.mxu0 %v2024
      %2376 = vmatprep.subr.bf16.mxu0 %v2019
      %2377 = vmatpush1.bf16.msra.mxu0 %v2018
      %2378 = vmatprep.subr.bf16.mxu0 %v2013
      %2379 = vmatpush1.bf16.msra.mxu0 %v2012
      %2380 = vmatprep.subr.bf16.mxu0 %v2007
      %2381 = vmatpush1.bf16.msra.mxu0 %v2006
      %2382 = vmatprep.subr.bf16.mxu0 %v2001
      %2383 = vmatpush1.bf16.msra.mxu0 %v2000
      %2384 = vmatprep.subr.bf16.mxu0 %v1995
      %2385 = vmatpush1.bf16.msra.mxu0 %v1994
      %2386 = vmatprep.subr.bf16.mxu0 %v1989
      %2387 = vmatpush1.bf16.msra.mxu0 %v1988
      %2388 = vmatprep.subr.bf16.mxu0 %v2079
      %2389 = vmatpush2.bf16.msra.mxu0 %v2078
      %2390 = vmatprep.subr.bf16.mxu0 %v2073
      %2391 = vmatpush2.bf16.msra.mxu0 %v2072
      %2392 = vmatprep.subr.bf16.mxu0 %v2067
      %2393 = vmatpush2.bf16.msra.mxu0 %v2066
      %2394 = vmatprep.subr.bf16.mxu0 %v2061
      %2395 = vmatpush2.bf16.msra.mxu0 %v2060
      %2396 = vmatprep.subr.bf16.mxu0 %v2055
      %2397 = vmatpush2.bf16.msra.mxu0 %v2054
      %2398 = vmatprep.subr.bf16.mxu0 %v2049
      %2399 = vmatpush2.bf16.msra.mxu0 %v2048
      %2400 = vmatprep.subr.bf16.mxu0 %v2043
      %2401 = vmatpush2.bf16.msra.mxu0 %v2042
      %2402 = vmatprep.subr.bf16.mxu0 %v2037
      %2403 = vmatpush2.bf16.msra.mxu0 %v2036
      %2404 = vmatprep.mubr.bf16.mxu0 %v1381
      %2405 = vmatmul.mubr.bf16.gmra.mxu0 %v1380
      %v2406 = vpop.f32.mrf.mxu0
      %v2407 = vadd.f32 %v1160, %v2406
      %v2408 = vpop.f32.mrf.mxu0
      %v2409 = vadd.f32 %v1162, %v2408
      %v2410 = vpop.f32.mrf.mxu0
      %v2411 = vadd.f32 %v1164, %v2410
      %v2412 = vpop.f32.mrf.mxu0
      %v2413 = vadd.f32 %v1166, %v2412
      %2414 = vmatprep.mubr.bf16.mxu0 %v1385
      %2415 = vmatmul.mubr.bf16.gmra.mxu0 %v1384
      %v2416 = vpop.f32.mrf.mxu0
      %v2417 = vadd.f32 %v1170, %v2416
      %v2418 = vpop.f32.mrf.mxu0
      %v2419 = vadd.f32 %v1172, %v2418
      %v2420 = vpop.f32.mrf.mxu0
      %v2421 = vadd.f32 %v1174, %v2420
      %v2422 = vpop.f32.mrf.mxu0
      %v2423 = vadd.f32 %v1176, %v2422
      %2424 = vmatprep.mubr.bf16.mxu0 %v1389
      %2425 = vmatmul.mubr.bf16.gmra.mxu0 %v1388
      %v2426 = vpop.f32.mrf.mxu0
      %v2427 = vadd.f32 %v1180, %v2426
      %v2428 = vpop.f32.mrf.mxu0
      %v2429 = vadd.f32 %v1182, %v2428
      %v2430 = vpop.f32.mrf.mxu0
      %v2431 = vadd.f32 %v1184, %v2430
      %v2432 = vpop.f32.mrf.mxu0
      %v2433 = vadd.f32 %v1186, %v2432
      %2434 = vmatprep.mubr.bf16.mxu0 %v1393
      %2435 = vmatmul.mubr.bf16.gmra.mxu0 %v1392
      %v2436 = vpop.f32.mrf.mxu0
      %v2437 = vadd.f32 %v1190, %v2436
      %v2438 = vpop.f32.mrf.mxu0
      %v2439 = vadd.f32 %v1192, %v2438
      %v2440 = vpop.f32.mrf.mxu0
      %v2441 = vpop.f32.mrf.mxu0
      %2442 = vdwg.mxu0
      %2443 = vmatprep.subr.bf16.mxu0 %v2127
      %2444 = vmatpush1.bf16.msra.mxu0 %v2126
      %2445 = vmatprep.subr.bf16.mxu0 %v2121
      %2446 = vmatpush1.bf16.msra.mxu0 %v2120
      %2447 = vmatprep.subr.bf16.mxu0 %v2115
      %2448 = vmatpush1.bf16.msra.mxu0 %v2114
      %2449 = vmatprep.subr.bf16.mxu0 %v2109
      %2450 = vmatpush1.bf16.msra.mxu0 %v2108
      %2451 = vmatprep.subr.bf16.mxu0 %v2103
      %2452 = vmatpush1.bf16.msra.mxu0 %v2102
      %2453 = vmatprep.subr.bf16.mxu0 %v2097
      %2454 = vmatpush1.bf16.msra.mxu0 %v2096
      %2455 = vmatprep.subr.bf16.mxu0 %v2091
      %2456 = vmatpush1.bf16.msra.mxu0 %v2090
      %2457 = vmatprep.subr.bf16.mxu0 %v2085
      %2458 = vmatpush1.bf16.msra.mxu0 %v2084
      %2459 = vmatprep.subr.bf16.mxu0 %v2175
      %2460 = vmatpush2.bf16.msra.mxu0 %v2174
      %2461 = vmatprep.subr.bf16.mxu0 %v2169
      %2462 = vmatpush2.bf16.msra.mxu0 %v2168
      %2463 = vmatprep.subr.bf16.mxu0 %v2163
      %2464 = vmatpush2.bf16.msra.mxu0 %v2162
      %2465 = vmatprep.subr.bf16.mxu0 %v2157
      %2466 = vmatpush2.bf16.msra.mxu0 %v2156
      %2467 = vmatprep.subr.bf16.mxu0 %v2151
      %2468 = vmatpush2.bf16.msra.mxu0 %v2150
      %2469 = vmatprep.subr.bf16.mxu0 %v2145
      %2470 = vmatpush2.bf16.msra.mxu0 %v2144
      %2471 = vmatprep.subr.bf16.mxu0 %v2139
      %2472 = vmatpush2.bf16.msra.mxu0 %v2138
      %2473 = vmatprep.subr.bf16.mxu0 %v2133
      %2474 = vmatpush2.bf16.msra.mxu0 %v2132
      %2475 = vmatprep.mubr.bf16.mxu0 %v1383
      %2476 = vmatmul.mubr.bf16.gmra.mxu0 %v1382
      %v2477 = vpop.f32.mrf.mxu0
      %v2478 = vadd.f32 %v2407, %v2477
      %v2479 = vpop.f32.mrf.mxu0
      %v2480 = vadd.f32 %v2409, %v2479
      %v2481 = vpop.f32.mrf.mxu0
      %v2482 = vadd.f32 %v2411, %v2481
      %v2483 = vpop.f32.mrf.mxu0
      %v2484 = vadd.f32 %v2413, %v2483
      %2485 = vmatprep.mubr.bf16.mxu0 %v1387
      %2486 = vmatmul.mubr.bf16.gmra.mxu0 %v1386
      %v2487 = vpop.f32.mrf.mxu0
      %v2488 = vadd.f32 %v2417, %v2487
      %v2489 = vpop.f32.mrf.mxu0
      %v2490 = vadd.f32 %v2419, %v2489
      %v2491 = vpop.f32.mrf.mxu0
      %v2492 = vadd.f32 %v2421, %v2491
      %v2493 = vpop.f32.mrf.mxu0
      %v2494 = vadd.f32 %v2423, %v2493
      %2495 = vmatprep.mubr.bf16.mxu0 %v1391
      %2496 = vmatmul.mubr.bf16.gmra.mxu0 %v1390
      %v2497 = vpop.f32.mrf.mxu0
      %v2498 = vadd.f32 %v2427, %v2497
      %v2499 = vpop.f32.mrf.mxu0
      %v2500 = vadd.f32 %v2429, %v2499
      %v2501 = vpop.f32.mrf.mxu0
      %v2502 = vadd.f32 %v2431, %v2501
      %v2503 = vpop.f32.mrf.mxu0
      %v2504 = vadd.f32 %v2433, %v2503
      %2505 = vmatprep.mubr.bf16.mxu0 %v1395
      %2506 = vmatmul.mubr.bf16.gmra.mxu0 %v1394
      %v2507 = vpop.f32.mrf.mxu0
      %v2508 = vadd.f32 %v2437, %v2507
      %v2509 = vpop.f32.mrf.mxu0
      %v2510 = vadd.f32 %v2439, %v2509
      %v2511 = vpop.f32.mrf.mxu0
      %v2512 = vpop.f32.mrf.mxu0
      %2513 = vdwg.mxu0
      %2514 = vmatprep.subr.bf16.mxu0 %v2033
      %2515 = vmatpush1.bf16.msra.mxu0 %v2032
      %2516 = vmatprep.subr.bf16.mxu0 %v2027
      %2517 = vmatpush1.bf16.msra.mxu0 %v2026
      %2518 = vmatprep.subr.bf16.mxu0 %v2021
      %2519 = vmatpush1.bf16.msra.mxu0 %v2020
      %2520 = vmatprep.subr.bf16.mxu0 %v2015
      %2521 = vmatpush1.bf16.msra.mxu0 %v2014
      %2522 = vmatprep.subr.bf16.mxu0 %v2009
      %2523 = vmatpush1.bf16.msra.mxu0 %v2008
      %2524 = vmatprep.subr.bf16.mxu0 %v2003
      %2525 = vmatpush1.bf16.msra.mxu0 %v2002
      %2526 = vmatprep.subr.bf16.mxu0 %v1997
      %2527 = vmatpush1.bf16.msra.mxu0 %v1996
      %2528 = vmatprep.subr.bf16.mxu0 %v1991
      %2529 = vmatpush1.bf16.msra.mxu0 %v1990
      %2530 = vmatprep.subr.bf16.mxu0 %v2081
      %2531 = vmatpush2.bf16.msra.mxu0 %v2080
      %2532 = vmatprep.subr.bf16.mxu0 %v2075
      %2533 = vmatpush2.bf16.msra.mxu0 %v2074
      %2534 = vmatprep.subr.bf16.mxu0 %v2069
      %2535 = vmatpush2.bf16.msra.mxu0 %v2068
      %2536 = vmatprep.subr.bf16.mxu0 %v2063
      %2537 = vmatpush2.bf16.msra.mxu0 %v2062
      %2538 = vmatprep.subr.bf16.mxu0 %v2057
      %2539 = vmatpush2.bf16.msra.mxu0 %v2056
      %2540 = vmatprep.subr.bf16.mxu0 %v2051
      %2541 = vmatpush2.bf16.msra.mxu0 %v2050
      %2542 = vmatprep.subr.bf16.mxu0 %v2045
      %2543 = vmatpush2.bf16.msra.mxu0 %v2044
      %2544 = vmatprep.subr.bf16.mxu0 %v2039
      %2545 = vmatpush2.bf16.msra.mxu0 %v2038
      %2546 = vmatprep.mubr.bf16.mxu0 %v1381
      %2547 = vmatmul.mubr.bf16.gmra.mxu0 %v1380
      %v2548 = vpop.f32.mrf.mxu0
      %v2549 = vadd.f32 %v1231, %v2548
      %v2550 = vpop.f32.mrf.mxu0
      %v2551 = vadd.f32 %v1233, %v2550
      %v2552 = vpop.f32.mrf.mxu0
      %v2553 = vadd.f32 %v1235, %v2552
      %v2554 = vpop.f32.mrf.mxu0
      %v2555 = vadd.f32 %v1237, %v2554
      %2556 = vmatprep.mubr.bf16.mxu0 %v1385
      %2557 = vmatmul.mubr.bf16.gmra.mxu0 %v1384
      %v2558 = vpop.f32.mrf.mxu0
      %v2559 = vadd.f32 %v1241, %v2558
      %v2560 = vpop.f32.mrf.mxu0
      %v2561 = vadd.f32 %v1243, %v2560
      %v2562 = vpop.f32.mrf.mxu0
      %v2563 = vadd.f32 %v1245, %v2562
      %v2564 = vpop.f32.mrf.mxu0
      %v2565 = vadd.f32 %v1247, %v2564
      %2566 = vmatprep.mubr.bf16.mxu0 %v1389
      %2567 = vmatmul.mubr.bf16.gmra.mxu0 %v1388
      %v2568 = vpop.f32.mrf.mxu0
      %v2569 = vadd.f32 %v1251, %v2568
      %v2570 = vpop.f32.mrf.mxu0
      %v2571 = vadd.f32 %v1253, %v2570
      %v2572 = vpop.f32.mrf.mxu0
      %v2573 = vadd.f32 %v1255, %v2572
      %v2574 = vpop.f32.mrf.mxu0
      %v2575 = vadd.f32 %v1257, %v2574
      %2576 = vmatprep.mubr.bf16.mxu0 %v1393
      %2577 = vmatmul.mubr.bf16.gmra.mxu0 %v1392
      %v2578 = vpop.f32.mrf.mxu0
      %v2579 = vadd.f32 %v1261, %v2578
      %v2580 = vpop.f32.mrf.mxu0
      %v2581 = vadd.f32 %v1263, %v2580
      %v2582 = vpop.f32.mrf.mxu0
      %v2583 = vpop.f32.mrf.mxu0
      %2584 = vdwg.mxu0
      %2585 = vmatprep.subr.bf16.mxu0 %v2129
      %2586 = vmatpush1.bf16.msra.mxu0 %v2128
      %2587 = vmatprep.subr.bf16.mxu0 %v2123
      %2588 = vmatpush1.bf16.msra.mxu0 %v2122
      %2589 = vmatprep.subr.bf16.mxu0 %v2117
      %2590 = vmatpush1.bf16.msra.mxu0 %v2116
      %2591 = vmatprep.subr.bf16.mxu0 %v2111
      %2592 = vmatpush1.bf16.msra.mxu0 %v2110
      %2593 = vmatprep.subr.bf16.mxu0 %v2105
      %2594 = vmatpush1.bf16.msra.mxu0 %v2104
      %2595 = vmatprep.subr.bf16.mxu0 %v2099
      %2596 = vmatpush1.bf16.msra.mxu0 %v2098
      %2597 = vmatprep.subr.bf16.mxu0 %v2093
      %2598 = vmatpush1.bf16.msra.mxu0 %v2092
      %2599 = vmatprep.subr.bf16.mxu0 %v2087
      %2600 = vmatpush1.bf16.msra.mxu0 %v2086
      %2601 = vmatprep.subr.bf16.mxu0 %v2177
      %2602 = vmatpush2.bf16.msra.mxu0 %v2176
      %2603 = vmatprep.subr.bf16.mxu0 %v2171
      %2604 = vmatpush2.bf16.msra.mxu0 %v2170
      %2605 = vmatprep.subr.bf16.mxu0 %v2165
      %2606 = vmatpush2.bf16.msra.mxu0 %v2164
      %2607 = vmatprep.subr.bf16.mxu0 %v2159
      %2608 = vmatpush2.bf16.msra.mxu0 %v2158
      %2609 = vmatprep.subr.bf16.mxu0 %v2153
      %2610 = vmatpush2.bf16.msra.mxu0 %v2152
      %2611 = vmatprep.subr.bf16.mxu0 %v2147
      %2612 = vmatpush2.bf16.msra.mxu0 %v2146
      %2613 = vmatprep.subr.bf16.mxu0 %v2141
      %2614 = vmatpush2.bf16.msra.mxu0 %v2140
      %2615 = vmatprep.subr.bf16.mxu0 %v2135
      %2616 = vmatpush2.bf16.msra.mxu0 %v2134
      %2617 = vmatprep.mubr.bf16.mxu0 %v1383
      %2618 = vmatmul.mubr.bf16.gmra.mxu0 %v1382
      %v2619 = vpop.f32.mrf.mxu0
      %v2620 = vadd.f32 %v2549, %v2619
      %v2621 = vpop.f32.mrf.mxu0
      %v2622 = vadd.f32 %v2551, %v2621
      %v2623 = vpop.f32.mrf.mxu0
      %v2624 = vadd.f32 %v2553, %v2623
      %v2625 = vpop.f32.mrf.mxu0
      %v2626 = vadd.f32 %v2555, %v2625
      %2627 = vmatprep.mubr.bf16.mxu0 %v1387
      %2628 = vmatmul.mubr.bf16.gmra.mxu0 %v1386
      %v2629 = vpop.f32.mrf.mxu0
      %v2630 = vadd.f32 %v2559, %v2629
      %v2631 = vpop.f32.mrf.mxu0
      %v2632 = vadd.f32 %v2561, %v2631
      %v2633 = vpop.f32.mrf.mxu0
      %v2634 = vadd.f32 %v2563, %v2633
      %v2635 = vpop.f32.mrf.mxu0
      %v2636 = vadd.f32 %v2565, %v2635
      %2637 = vmatprep.mubr.bf16.mxu0 %v1391
      %2638 = vmatmul.mubr.bf16.gmra.mxu0 %v1390
      %v2639 = vpop.f32.mrf.mxu0
      %v2640 = vadd.f32 %v2569, %v2639
      %v2641 = vpop.f32.mrf.mxu0
      %v2642 = vadd.f32 %v2571, %v2641
      %v2643 = vpop.f32.mrf.mxu0
      %v2644 = vadd.f32 %v2573, %v2643
      %v2645 = vpop.f32.mrf.mxu0
      %v2646 = vadd.f32 %v2575, %v2645
      %2647 = vmatprep.mubr.bf16.mxu0 %v1395
      %2648 = vmatmul.mubr.bf16.gmra.mxu0 %v1394
      %v2649 = vpop.f32.mrf.mxu0
      %v2650 = vadd.f32 %v2579, %v2649
      %v2651 = vpop.f32.mrf.mxu0
      %v2652 = vadd.f32 %v2581, %v2651
      %v2653 = vpop.f32.mrf.mxu0
      %v2654 = vpop.f32.mrf.mxu0
      %2655 = vdwg.mxu0
      %2656 = vmatprep.subr.bf16.mxu0 %v2035
      %2657 = vmatpush1.bf16.msra.mxu0 %v2034
      %2658 = vmatprep.subr.bf16.mxu0 %v2029
      %2659 = vmatpush1.bf16.msra.mxu0 %v2028
      %2660 = vmatprep.subr.bf16.mxu0 %v2023
      %2661 = vmatpush1.bf16.msra.mxu0 %v2022
      %2662 = vmatprep.subr.bf16.mxu0 %v2017
      %2663 = vmatpush1.bf16.msra.mxu0 %v2016
      %2664 = vmatprep.subr.bf16.mxu0 %v2011
      %2665 = vmatpush1.bf16.msra.mxu0 %v2010
      %2666 = vmatprep.subr.bf16.mxu0 %v2005
      %2667 = vmatpush1.bf16.msra.mxu0 %v2004
      %2668 = vmatprep.subr.bf16.mxu0 %v1999
      %2669 = vmatpush1.bf16.msra.mxu0 %v1998
      %2670 = vmatprep.subr.bf16.mxu0 %v1993
      %2671 = vmatpush1.bf16.msra.mxu0 %v1992
      %2672 = vmatprep.subr.bf16.mxu0 %v2083
      %2673 = vmatpush2.bf16.msra.mxu0 %v2082
      %2674 = vmatprep.subr.bf16.mxu0 %v2077
      %2675 = vmatpush2.bf16.msra.mxu0 %v2076
      %2676 = vmatprep.subr.bf16.mxu0 %v2071
      %2677 = vmatpush2.bf16.msra.mxu0 %v2070
      %2678 = vmatprep.subr.bf16.mxu0 %v2065
      %2679 = vmatpush2.bf16.msra.mxu0 %v2064
      %2680 = vmatprep.subr.bf16.mxu0 %v2059
      %2681 = vmatpush2.bf16.msra.mxu0 %v2058
      %2682 = vmatprep.subr.bf16.mxu0 %v2053
      %2683 = vmatpush2.bf16.msra.mxu0 %v2052
      %2684 = vmatprep.subr.bf16.mxu0 %v2047
      %2685 = vmatpush2.bf16.msra.mxu0 %v2046
      %2686 = vmatprep.subr.bf16.mxu0 %v2041
      %2687 = vmatpush2.bf16.msra.mxu0 %v2040
      %2688 = vmatprep.mubr.bf16.mxu0 %v1381
      %2689 = vmatmul.mubr.bf16.gmra.mxu0 %v1380
      %v2690 = vpop.f32.mrf.mxu0
      %v2691 = vadd.f32 %v1302, %v2690
      %v2692 = vpop.f32.mrf.mxu0
      %v2693 = vadd.f32 %v1304, %v2692
      %v2694 = vpop.f32.mrf.mxu0
      %v2695 = vadd.f32 %v1306, %v2694
      %v2696 = vpop.f32.mrf.mxu0
      %v2697 = vadd.f32 %v1308, %v2696
      %2698 = vmatprep.mubr.bf16.mxu0 %v1385
      %2699 = vmatmul.mubr.bf16.gmra.mxu0 %v1384
      %v2700 = vpop.f32.mrf.mxu0
      %v2701 = vadd.f32 %v1312, %v2700
      %v2702 = vpop.f32.mrf.mxu0
      %v2703 = vadd.f32 %v1314, %v2702
      %v2704 = vpop.f32.mrf.mxu0
      %v2705 = vadd.f32 %v1316, %v2704
      %v2706 = vpop.f32.mrf.mxu0
      %v2707 = vadd.f32 %v1318, %v2706
      %2708 = vmatprep.mubr.bf16.mxu0 %v1389
      %2709 = vmatmul.mubr.bf16.gmra.mxu0 %v1388
      %v2710 = vpop.f32.mrf.mxu0
      %v2711 = vadd.f32 %v1322, %v2710
      %v2712 = vpop.f32.mrf.mxu0
      %v2713 = vadd.f32 %v1324, %v2712
      %v2714 = vpop.f32.mrf.mxu0
      %v2715 = vadd.f32 %v1326, %v2714
      %v2716 = vpop.f32.mrf.mxu0
      %v2717 = vadd.f32 %v1328, %v2716
      %2718 = vmatprep.mubr.bf16.mxu0 %v1393
      %2719 = vmatmul.mubr.bf16.gmra.mxu0 %v1392
      %v2720 = vpop.f32.mrf.mxu0
      %v2721 = vadd.f32 %v1332, %v2720
      %v2722 = vpop.f32.mrf.mxu0
      %v2723 = vadd.f32 %v1334, %v2722
      %v2724 = vpop.f32.mrf.mxu0
      %v2725 = vpop.f32.mrf.mxu0
      %2726 = vdwg.mxu0
      %2727 = vmatprep.subr.bf16.mxu0 %v2131
      %2728 = vmatpush1.bf16.msra.mxu0 %v2130
      %2729 = vmatprep.subr.bf16.mxu0 %v2125
      %2730 = vmatpush1.bf16.msra.mxu0 %v2124
      %2731 = vmatprep.subr.bf16.mxu0 %v2119
      %2732 = vmatpush1.bf16.msra.mxu0 %v2118
      %2733 = vmatprep.subr.bf16.mxu0 %v2113
      %2734 = vmatpush1.bf16.msra.mxu0 %v2112
      %2735 = vmatprep.subr.bf16.mxu0 %v2107
      %2736 = vmatpush1.bf16.msra.mxu0 %v2106
      %2737 = vmatprep.subr.bf16.mxu0 %v2101
      %2738 = vmatpush1.bf16.msra.mxu0 %v2100
      %2739 = vmatprep.subr.bf16.mxu0 %v2095
      %2740 = vmatpush1.bf16.msra.mxu0 %v2094
      %2741 = vmatprep.subr.bf16.mxu0 %v2089
      %2742 = vmatpush1.bf16.msra.mxu0 %v2088
      %2743 = vmatprep.subr.bf16.mxu0 %v2179
      %2744 = vmatpush2.bf16.msra.mxu0 %v2178
      %2745 = vmatprep.subr.bf16.mxu0 %v2173
      %2746 = vmatpush2.bf16.msra.mxu0 %v2172
      %2747 = vmatprep.subr.bf16.mxu0 %v2167
      %2748 = vmatpush2.bf16.msra.mxu0 %v2166
      %2749 = vmatprep.subr.bf16.mxu0 %v2161
      %2750 = vmatpush2.bf16.msra.mxu0 %v2160
      %2751 = vmatprep.subr.bf16.mxu0 %v2155
      %2752 = vmatpush2.bf16.msra.mxu0 %v2154
      %2753 = vmatprep.subr.bf16.mxu0 %v2149
      %2754 = vmatpush2.bf16.msra.mxu0 %v2148
      %2755 = vmatprep.subr.bf16.mxu0 %v2143
      %2756 = vmatpush2.bf16.msra.mxu0 %v2142
      %2757 = vmatprep.subr.bf16.mxu0 %v2137
      %2758 = vmatpush2.bf16.msra.mxu0 %v2136
      %2759 = vmatprep.mubr.bf16.mxu0 %v1383
      %2760 = vmatmul.mubr.bf16.gmra.mxu0 %v1382
      %v2761 = vpop.f32.mrf.mxu0
      %v2762 = vadd.f32 %v2691, %v2761
      %v2763 = vpop.f32.mrf.mxu0
      %v2764 = vadd.f32 %v2693, %v2763
      %v2765 = vpop.f32.mrf.mxu0
      %v2766 = vadd.f32 %v2695, %v2765
      %v2767 = vpop.f32.mrf.mxu0
      %v2768 = vadd.f32 %v2697, %v2767
      %2769 = vmatprep.mubr.bf16.mxu0 %v1387
      %2770 = vmatmul.mubr.bf16.gmra.mxu0 %v1386
      %v2771 = vpop.f32.mrf.mxu0
      %v2772 = vadd.f32 %v2701, %v2771
      %v2773 = vpop.f32.mrf.mxu0
      %v2774 = vadd.f32 %v2703, %v2773
      %v2775 = vpop.f32.mrf.mxu0
      %v2776 = vadd.f32 %v2705, %v2775
      %v2777 = vpop.f32.mrf.mxu0
      %v2778 = vadd.f32 %v2707, %v2777
      %2779 = vmatprep.mubr.bf16.mxu0 %v1391
      %2780 = vmatmul.mubr.bf16.gmra.mxu0 %v1390
      %v2781 = vpop.f32.mrf.mxu0
      %v2782 = vadd.f32 %v2711, %v2781
      %v2783 = vpop.f32.mrf.mxu0
      %v2784 = vadd.f32 %v2713, %v2783
      %v2785 = vpop.f32.mrf.mxu0
      %v2786 = vadd.f32 %v2715, %v2785
      %v2787 = vpop.f32.mrf.mxu0
      %v2788 = vadd.f32 %v2717, %v2787
      %2789 = vmatprep.mubr.bf16.mxu0 %v1395
      %2790 = vmatmul.mubr.bf16.gmra.mxu0 %v1394
      %v2791 = vpop.f32.mrf.mxu0
      %v2792 = vadd.f32 %v2721, %v2791
      %v2793 = vpop.f32.mrf.mxu0
      %v2794 = vadd.f32 %v2723, %v2793
      %v2795 = vpop.f32.mrf.mxu0
      %v2796 = vpop.f32.mrf.mxu0
      %2797 = vdwg.mxu0
      %v2798 = vld [vmem:[%s4] sm:$0x3f]
      %v2800 = vlaneseq
      %v2801 = vshrl.u32 %v2800, 7
      %v2802 = vsub.s32 0, %v2801
      %v2803 = vrot.slane %v2798, %v2802
      %v2804 = vlaneseq
      %v2805 = vshrl.u32 %v2804, 7
      %v2806 = vsub.s32 1, %v2805
      %v2807 = vrot.slane %v2798, %v2806
      %v2808 = vlaneseq
      %v2809 = vshrl.u32 %v2808, 7
      %v2810 = vsub.s32 2, %v2809
      %v2811 = vrot.slane %v2798, %v2810
      %v2812 = vlaneseq
      %v2813 = vshrl.u32 %v2812, 7
      %v2814 = vsub.s32 3, %v2813
      %v2815 = vrot.slane %v2798, %v2814
      %v2816 = vlaneseq
      %v2817 = vshrl.u32 %v2816, 7
      %v2818 = vsub.s32 4, %v2817
      %v2819 = vrot.slane %v2798, %v2818
      %v2820 = vlaneseq
      %v2821 = vshrl.u32 %v2820, 7
      %v2822 = vsub.s32 5, %v2821
      %v2823 = vrot.slane %v2798, %v2822
      %v2830 = vadd.f32 %v2478, %v2803
      %v2831 = vadd.f32 %v2480, %v2807
      %v2832 = vadd.f32 %v2620, %v2811
      %v2833 = vadd.f32 %v2622, %v2815
      %v2834 = vadd.f32 %v2762, %v2819
      %v2835 = vadd.f32 %v2764, %v2823
      %v2836 = vadd.f32 %v2482, %v2803
      %v2837 = vadd.f32 %v2484, %v2807
      %v2838 = vadd.f32 %v2624, %v2811
      %v2839 = vadd.f32 %v2626, %v2815
      %v2840 = vadd.f32 %v2766, %v2819
      %v2841 = vadd.f32 %v2768, %v2823
      %v2842 = vadd.f32 %v2488, %v2803
      %v2843 = vadd.f32 %v2490, %v2807
      %v2844 = vadd.f32 %v2630, %v2811
      %v2845 = vadd.f32 %v2632, %v2815
      %v2846 = vadd.f32 %v2772, %v2819
      %v2847 = vadd.f32 %v2774, %v2823
      %v2848 = vadd.f32 %v2492, %v2803
      %v2849 = vadd.f32 %v2494, %v2807
      %v2850 = vadd.f32 %v2634, %v2811
      %v2851 = vadd.f32 %v2636, %v2815
      %v2852 = vadd.f32 %v2776, %v2819
      %v2853 = vadd.f32 %v2778, %v2823
      %v2854 = vadd.f32 %v2498, %v2803
      %v2855 = vadd.f32 %v2500, %v2807
      %v2856 = vadd.f32 %v2640, %v2811
      %v2857 = vadd.f32 %v2642, %v2815
      %v2858 = vadd.f32 %v2782, %v2819
      %v2859 = vadd.f32 %v2784, %v2823
      %v2860 = vadd.f32 %v2502, %v2803
      %v2861 = vadd.f32 %v2504, %v2807
      %v2862 = vadd.f32 %v2644, %v2811
      %v2863 = vadd.f32 %v2646, %v2815
      %v2864 = vadd.f32 %v2786, %v2819
      %v2865 = vadd.f32 %v2788, %v2823
      %v2866 = vadd.f32 %v2508, %v2803
      %v2867 = vadd.f32 %v2510, %v2807
      %v2868 = vadd.f32 %v2650, %v2811
      %v2869 = vadd.f32 %v2652, %v2815
      %v2870 = vadd.f32 %v2792, %v2819
      %v2871 = vadd.f32 %v2794, %v2823
      %v2872 = vadd.f32 %v2830, %v2831
      %v2873 = vadd.f32 %v2872, %v2832
      %v2874 = vadd.f32 %v2873, %v2833
      %v2875 = vadd.f32 %v2874, %v2834
      %v2876 = vadd.f32 %v2875, %v2835
      %v2877 = vadd.f32 %v2876, %v2836
      %v2878 = vadd.f32 %v2877, %v2837
      %v2879 = vadd.f32 %v2878, %v2838
      %v2880 = vadd.f32 %v2879, %v2839
      %v2881 = vadd.f32 %v2880, %v2840
      %v2882 = vadd.f32 %v2881, %v2841
      %v2883 = vadd.f32 %v2882, %v2842
      %v2884 = vadd.f32 %v2883, %v2843
      %v2885 = vadd.f32 %v2884, %v2844
      %v2886 = vadd.f32 %v2885, %v2845
      %v2887 = vadd.f32 %v2886, %v2846
      %v2888 = vadd.f32 %v2887, %v2847
      %v2889 = vadd.f32 %v2888, %v2848
      %v2890 = vadd.f32 %v2889, %v2849
      %v2891 = vadd.f32 %v2890, %v2850
      %v2892 = vadd.f32 %v2891, %v2851
      %v2893 = vadd.f32 %v2892, %v2852
      %v2894 = vadd.f32 %v2893, %v2853
      %v2895 = vadd.f32 %v2894, %v2854
      %v2896 = vadd.f32 %v2895, %v2855
      %v2897 = vadd.f32 %v2896, %v2856
      %v2898 = vadd.f32 %v2897, %v2857
      %v2899 = vadd.f32 %v2898, %v2858
      %v2900 = vadd.f32 %v2899, %v2859
      %v2901 = vadd.f32 %v2900, %v2860
      %v2902 = vadd.f32 %v2901, %v2861
      %v2903 = vadd.f32 %v2902, %v2862
      %v2904 = vadd.f32 %v2903, %v2863
      %v2905 = vadd.f32 %v2904, %v2864
      %v2906 = vadd.f32 %v2905, %v2865
      %vm2907 = vcmask 1040384
      %v2908 = vsel %vm2907, %v2866, 0.0
      %v2909 = vadd.f32 %v2906, %v2908
      %v2910 = vsel %vm2907, %v2867, 0.0
      %v2911 = vadd.f32 %v2909, %v2910
      %v2912 = vsel %vm2907, %v2868, 0.0
      %v2913 = vadd.f32 %v2911, %v2912
      %v2914 = vsel %vm2907, %v2869, 0.0
      %v2915 = vadd.f32 %v2913, %v2914
      %v2916 = vsel %vm2907, %v2870, 0.0
      %v2917 = vadd.f32 %v2915, %v2916
      %v2918 = vsel %vm2907, %v2871, 0.0
      %v2919 = vadd.f32 %v2917, %v2918
      %2920 = vadd.xlane.f32.xlu0 %v2919
      %v2921 = vpop.xlane.xlu0 %2920
      %v2922 = vrot.slane %v2921, 4
      %v2923 = vadd.f32 %v2921, %v2922
      %v2924 = vrot.slane %v2923, 2
      %v2925 = vadd.f32 %v2923, %v2924
      %v2926 = vrot.slane %v2925, 1
      %v2927 = vadd.f32 %v2925, %v2926
      %s2928 = vtos %v2927
      %s2929 = smul.f32 %s2928, 2.6573129e-05
      %v2930 = vstv %s2929
      %v2931 = vsub.f32 %v2830, %v2930
      %v2932 = vsub.f32 %v2831, %v2930
      %v2933 = vsub.f32 %v2832, %v2930
      %v2934 = vsub.f32 %v2833, %v2930
      %v2935 = vsub.f32 %v2834, %v2930
      %v2936 = vsub.f32 %v2835, %v2930
      %v2937 = vsub.f32 %v2836, %v2930
      %v2938 = vsub.f32 %v2837, %v2930
      %v2939 = vsub.f32 %v2838, %v2930
      %v2940 = vsub.f32 %v2839, %v2930
      %v2941 = vsub.f32 %v2840, %v2930
      %v2942 = vsub.f32 %v2841, %v2930
      %v2943 = vsub.f32 %v2842, %v2930
      %v2944 = vsub.f32 %v2843, %v2930
      %v2945 = vsub.f32 %v2844, %v2930
      %v2946 = vsub.f32 %v2845, %v2930
      %v2947 = vsub.f32 %v2846, %v2930
      %v2948 = vsub.f32 %v2847, %v2930
      %v2949 = vsub.f32 %v2848, %v2930
      %v2950 = vsub.f32 %v2849, %v2930
      %v2951 = vsub.f32 %v2850, %v2930
      %v2952 = vsub.f32 %v2851, %v2930
      %v2953 = vsub.f32 %v2852, %v2930
      %v2954 = vsub.f32 %v2853, %v2930
      %v2955 = vsub.f32 %v2854, %v2930
      %v2956 = vsub.f32 %v2855, %v2930
      %v2957 = vsub.f32 %v2856, %v2930
      %v2958 = vsub.f32 %v2857, %v2930
      %v2959 = vsub.f32 %v2858, %v2930
      %v2960 = vsub.f32 %v2859, %v2930
      %v2961 = vsub.f32 %v2860, %v2930
      %v2962 = vsub.f32 %v2861, %v2930
      %v2963 = vsub.f32 %v2862, %v2930
      %v2964 = vsub.f32 %v2863, %v2930
      %v2965 = vsub.f32 %v2864, %v2930
      %v2966 = vsub.f32 %v2865, %v2930
      %v2967 = vsub.f32 %v2866, %v2930
      %v2968 = vsub.f32 %v2867, %v2930
      %v2969 = vsub.f32 %v2868, %v2930
      %v2970 = vsub.f32 %v2869, %v2930
      %v2971 = vsub.f32 %v2870, %v2930
      %v2972 = vsub.f32 %v2871, %v2930
      %v2973 = vmul.f32 %v2931, %v2931
      %v2974 = vmul.f32 %v2932, %v2932
      %v2975 = vmul.f32 %v2933, %v2933
      %v2976 = vmul.f32 %v2934, %v2934
      %v2977 = vmul.f32 %v2935, %v2935
      %v2978 = vmul.f32 %v2936, %v2936
      %v2979 = vmul.f32 %v2937, %v2937
      %v2980 = vmul.f32 %v2938, %v2938
      %v2981 = vmul.f32 %v2939, %v2939
      %v2982 = vmul.f32 %v2940, %v2940
      %v2983 = vmul.f32 %v2941, %v2941
      %v2984 = vmul.f32 %v2942, %v2942
      %v2985 = vmul.f32 %v2943, %v2943
      %v2986 = vmul.f32 %v2944, %v2944
      %v2987 = vmul.f32 %v2945, %v2945
      %v2988 = vmul.f32 %v2946, %v2946
      %v2989 = vmul.f32 %v2947, %v2947
      %v2990 = vmul.f32 %v2948, %v2948
      %v2991 = vmul.f32 %v2949, %v2949
      %v2992 = vmul.f32 %v2950, %v2950
      %v2993 = vmul.f32 %v2951, %v2951
      %v2994 = vmul.f32 %v2952, %v2952
      %v2995 = vmul.f32 %v2953, %v2953
      %v2996 = vmul.f32 %v2954, %v2954
      %v2997 = vmul.f32 %v2955, %v2955
      %v2998 = vmul.f32 %v2956, %v2956
      %v2999 = vmul.f32 %v2957, %v2957
      %v3000 = vmul.f32 %v2958, %v2958
      %v3001 = vmul.f32 %v2959, %v2959
      %v3002 = vmul.f32 %v2960, %v2960
      %v3003 = vmul.f32 %v2961, %v2961
      %v3004 = vmul.f32 %v2962, %v2962
      %v3005 = vmul.f32 %v2963, %v2963
      %v3006 = vmul.f32 %v2964, %v2964
      %v3007 = vmul.f32 %v2965, %v2965
      %v3008 = vmul.f32 %v2966, %v2966
      %v3009 = vmul.f32 %v2967, %v2967
      %v3010 = vmul.f32 %v2968, %v2968
      %v3011 = vmul.f32 %v2969, %v2969
      %v3012 = vmul.f32 %v2970, %v2970
      %v3013 = vmul.f32 %v2971, %v2971
      %v3014 = vmul.f32 %v2972, %v2972
      %v3015 = vadd.f32 %v2973, %v2974
      %v3016 = vadd.f32 %v3015, %v2975
      %v3017 = vadd.f32 %v3016, %v2976
      %v3018 = vadd.f32 %v3017, %v2977
      %v3019 = vadd.f32 %v3018, %v2978
      %v3020 = vadd.f32 %v3019, %v2979
      %v3021 = vadd.f32 %v3020, %v2980
      %v3022 = vadd.f32 %v3021, %v2981
      %v3023 = vadd.f32 %v3022, %v2982
      %v3024 = vadd.f32 %v3023, %v2983
      %v3025 = vadd.f32 %v3024, %v2984
      %v3026 = vadd.f32 %v3025, %v2985
      %v3027 = vadd.f32 %v3026, %v2986
      %v3028 = vadd.f32 %v3027, %v2987
      %v3029 = vadd.f32 %v3028, %v2988
      %v3030 = vadd.f32 %v3029, %v2989
      %v3031 = vadd.f32 %v3030, %v2990
      %v3032 = vadd.f32 %v3031, %v2991
      %v3033 = vadd.f32 %v3032, %v2992
      %v3034 = vadd.f32 %v3033, %v2993
      %v3035 = vadd.f32 %v3034, %v2994
      %v3036 = vadd.f32 %v3035, %v2995
      %v3037 = vadd.f32 %v3036, %v2996
      %v3038 = vadd.f32 %v3037, %v2997
      %v3039 = vadd.f32 %v3038, %v2998
      %v3040 = vadd.f32 %v3039, %v2999
      %v3041 = vadd.f32 %v3040, %v3000
      %v3042 = vadd.f32 %v3041, %v3001
      %v3043 = vadd.f32 %v3042, %v3002
      %v3044 = vadd.f32 %v3043, %v3003
      %v3045 = vadd.f32 %v3044, %v3004
      %v3046 = vadd.f32 %v3045, %v3005
      %v3047 = vadd.f32 %v3046, %v3006
      %v3048 = vadd.f32 %v3047, %v3007
      %v3049 = vadd.f32 %v3048, %v3008
      %v3050 = vsel %vm2907, %v3009, 0.0
      %v3051 = vadd.f32 %v3049, %v3050
      %v3052 = vsel %vm2907, %v3010, 0.0
      %v3053 = vadd.f32 %v3051, %v3052
      %v3054 = vsel %vm2907, %v3011, 0.0
      %v3055 = vadd.f32 %v3053, %v3054
      %v3056 = vsel %vm2907, %v3012, 0.0
      %v3057 = vadd.f32 %v3055, %v3056
      %v3058 = vsel %vm2907, %v3013, 0.0
      %v3059 = vadd.f32 %v3057, %v3058
      %v3060 = vsel %vm2907, %v3014, 0.0
      %v3061 = vadd.f32 %v3059, %v3060
      %3062 = vadd.xlane.f32.xlu0 %v3061
      %v3063 = vpop.xlane.xlu0 %3062
      %v3064 = vrot.slane %v3063, 4
      %v3065 = vadd.f32 %v3063, %v3064
      %v3066 = vrot.slane %v3065, 2
      %v3067 = vadd.f32 %v3065, %v3066
      %v3068 = vrot.slane %v3067, 1
      %v3069 = vadd.f32 %v3067, %v3068
      %s3070 = vtos %v3069
      %s3071 = smul.f32 %s3070, 2.6573129e-05
      %s3072 = sadd.f32 %s3071, 1e-05
      %v3073 = vstv %s3072
      %v3074 = vrsqrt.pop %v3073
      %s3075 = vtos %v3074
      %v3076 = vstv %s3075
      %v3077 = vmul.f32 %v2931, %v3076
      %v3078 = vmul.f32 %v2932, %v3076
      %v3079 = vmul.f32 %v2933, %v3076
      %v3080 = vmul.f32 %v2934, %v3076
      %v3081 = vmul.f32 %v2935, %v3076
      %v3082 = vmul.f32 %v2936, %v3076
      %v3083 = vmul.f32 %v2937, %v3076
      %v3084 = vmul.f32 %v2938, %v3076
      %v3085 = vmul.f32 %v2939, %v3076
      %v3086 = vmul.f32 %v2940, %v3076
      %v3087 = vmul.f32 %v2941, %v3076
      %v3088 = vmul.f32 %v2942, %v3076
      %v3089 = vmul.f32 %v2943, %v3076
      %v3090 = vmul.f32 %v2944, %v3076
      %v3091 = vmul.f32 %v2945, %v3076
      %v3092 = vmul.f32 %v2946, %v3076
      %v3093 = vmul.f32 %v2947, %v3076
      %v3094 = vmul.f32 %v2948, %v3076
      %v3095 = vmul.f32 %v2949, %v3076
      %v3096 = vmul.f32 %v2950, %v3076
      %v3097 = vmul.f32 %v2951, %v3076
      %v3098 = vmul.f32 %v2952, %v3076
      %v3099 = vmul.f32 %v2953, %v3076
      %v3100 = vmul.f32 %v2954, %v3076
      %v3101 = vmul.f32 %v2955, %v3076
      %v3102 = vmul.f32 %v2956, %v3076
      %v3103 = vmul.f32 %v2957, %v3076
      %v3104 = vmul.f32 %v2958, %v3076
      %v3105 = vmul.f32 %v2959, %v3076
      %v3106 = vmul.f32 %v2960, %v3076
      %v3107 = vmul.f32 %v2961, %v3076
      %v3108 = vmul.f32 %v2962, %v3076
      %v3109 = vmul.f32 %v2963, %v3076
      %v3110 = vmul.f32 %v2964, %v3076
      %v3111 = vmul.f32 %v2965, %v3076
      %v3112 = vmul.f32 %v2966, %v3076
      %v3113 = vmul.f32 %v2967, %v3076
      %v3114 = vmul.f32 %v2968, %v3076
      %v3115 = vmul.f32 %v2969, %v3076
      %v3116 = vmul.f32 %v2970, %v3076
      %v3117 = vmul.f32 %v2971, %v3076
      %v3118 = vmul.f32 %v2972, %v3076
      %v3119 = vld [vmem:[%s5] sm:$0xff]
      %v3120 = vld [vmem:[%s5 + $0x8] sm:$0xff]
      %v3121 = vld [vmem:[%s5 + $0x10] sm:$0xff]
      %v3122 = vld [vmem:[%s5 + $0x18] sm:$0xff]
      %v3123 = vld [vmem:[%s5 + $0x20] sm:$0xff]
      %v3124 = vld [vmem:[%s5 + $0x28] sm:$0xff]
      %v3125 = vld [vmem:[%s5 + $0x30] sm:$0xff]
      %v3126 = vld [vmem:[%s5 + $0x38] sm:$0xff]
      %v3127 = vld [vmem:[%s5 + $0x40] sm:$0xff]
      %v3128 = vld [vmem:[%s5 + $0x48] sm:$0xff]
      %v3129 = vld [vmem:[%s5 + $0x50] sm:$0xff]
      %v3130 = vld [vmem:[%s5 + $0x58] sm:$0xff]
      %v3131 = vld [vmem:[%s5 + $0x60] sm:$0xff]
      %v3132 = vld [vmem:[%s5 + $0x68] sm:$0xff]
      %v3133 = vld [vmem:[%s5 + $0x70] sm:$0xff]
      %v3134 = vld [vmem:[%s5 + $0x78] sm:$0xff]
      %v3135 = vld [vmem:[%s5 + $0x80] sm:$0xff]
      %v3136 = vld [vmem:[%s5 + $0x88] sm:$0xff]
      %v3137 = vld [vmem:[%s5 + $0x90] sm:$0xff]
      %v3138 = vld [vmem:[%s5 + $0x98] sm:$0xff]
      %v3139 = vld [vmem:[%s5 + $0xa0] sm:$0xff]
      %v3140 = vld [vmem:[%s5 + $0xa8] sm:$0xff]
      %v3141 = vld [vmem:[%s5 + $0xb0] sm:$0xff]
      %v3142 = vld [vmem:[%s5 + $0xb8] sm:$0xff]
      %v3143 = vld [vmem:[%s5 + $0xc0] sm:$0xff]
      %v3144 = vld [vmem:[%s5 + $0xc8] sm:$0xff]
      %v3145 = vld [vmem:[%s5 + $0xd0] sm:$0xff]
      %v3146 = vld [vmem:[%s5 + $0xd8] sm:$0xff]
      %v3147 = vld [vmem:[%s5 + $0xe0] sm:$0xff]
      %v3148 = vld [vmem:[%s5 + $0xe8] sm:$0xff]
      %v3149 = vld [vmem:[%s5 + $0xf0] sm:$0xff]
      %v3150 = vld [vmem:[%s5 + $0xf8] sm:$0xff]
      %v3151 = vld [vmem:[%s5 + $0x100] sm:$0xff]
      %v3152 = vld [vmem:[%s5 + $0x108] sm:$0xff]
      %v3153 = vld [vmem:[%s5 + $0x110] sm:$0xff]
      %v3154 = vld [vmem:[%s5 + $0x118] sm:$0xff]
      %v3155 = vld [vmem:[%s5 + $0x120] sm:$0x1]
      %v3156 = vld [vmem:[%s5 + $0x128] sm:$0x1]
      %v3157 = vld [vmem:[%s5 + $0x130] sm:$0x1]
      %v3158 = vld [vmem:[%s5 + $0x138] sm:$0x1]
      %v3159 = vld [vmem:[%s5 + $0x140] sm:$0x1]
      %v3160 = vld [vmem:[%s5 + $0x148] sm:$0x1]
      %v3161 = vmul.f32 %v3077, %v3119
      %v3162 = vmul.f32 %v3078, %v3120
      %v3163 = vmul.f32 %v3079, %v3121
      %v3164 = vmul.f32 %v3080, %v3122
      %v3165 = vmul.f32 %v3081, %v3123
      %v3166 = vmul.f32 %v3082, %v3124
      %v3167 = vmul.f32 %v3083, %v3125
      %v3168 = vmul.f32 %v3084, %v3126
      %v3169 = vmul.f32 %v3085, %v3127
      %v3170 = vmul.f32 %v3086, %v3128
      %v3171 = vmul.f32 %v3087, %v3129
      %v3172 = vmul.f32 %v3088, %v3130
      %v3173 = vmul.f32 %v3089, %v3131
      %v3174 = vmul.f32 %v3090, %v3132
      %v3175 = vmul.f32 %v3091, %v3133
      %v3176 = vmul.f32 %v3092, %v3134
      %v3177 = vmul.f32 %v3093, %v3135
      %v3178 = vmul.f32 %v3094, %v3136
      %v3179 = vmul.f32 %v3095, %v3137
      %v3180 = vmul.f32 %v3096, %v3138
      %v3181 = vmul.f32 %v3097, %v3139
      %v3182 = vmul.f32 %v3098, %v3140
      %v3183 = vmul.f32 %v3099, %v3141
      %v3184 = vmul.f32 %v3100, %v3142
      %v3185 = vmul.f32 %v3101, %v3143
      %v3186 = vmul.f32 %v3102, %v3144
      %v3187 = vmul.f32 %v3103, %v3145
      %v3188 = vmul.f32 %v3104, %v3146
      %v3189 = vmul.f32 %v3105, %v3147
      %v3190 = vmul.f32 %v3106, %v3148
      %v3191 = vmul.f32 %v3107, %v3149
      %v3192 = vmul.f32 %v3108, %v3150
      %v3193 = vmul.f32 %v3109, %v3151
      %v3194 = vmul.f32 %v3110, %v3152
      %v3195 = vmul.f32 %v3111, %v3153
      %v3196 = vmul.f32 %v3112, %v3154
      %v3197 = vmul.f32 %v3113, %v3155
      %v3198 = vmul.f32 %v3114, %v3156
      %v3199 = vmul.f32 %v3115, %v3157
      %v3200 = vmul.f32 %v3116, %v3158
      %v3201 = vmul.f32 %v3117, %v3159
      %v3202 = vmul.f32 %v3118, %v3160
      %v3203 = vld [vmem:[%s6] sm:$0xff]
      %v3204 = vld [vmem:[%s6 + $0x8] sm:$0xff]
      %v3205 = vld [vmem:[%s6 + $0x10] sm:$0xff]
      %v3206 = vld [vmem:[%s6 + $0x18] sm:$0xff]
      %v3207 = vld [vmem:[%s6 + $0x20] sm:$0xff]
      %v3208 = vld [vmem:[%s6 + $0x28] sm:$0xff]
      %v3209 = vld [vmem:[%s6 + $0x30] sm:$0xff]
      %v3210 = vld [vmem:[%s6 + $0x38] sm:$0xff]
      %v3211 = vld [vmem:[%s6 + $0x40] sm:$0xff]
      %v3212 = vld [vmem:[%s6 + $0x48] sm:$0xff]
      %v3213 = vld [vmem:[%s6 + $0x50] sm:$0xff]
      %v3214 = vld [vmem:[%s6 + $0x58] sm:$0xff]
      %v3215 = vld [vmem:[%s6 + $0x60] sm:$0xff]
      %v3216 = vld [vmem:[%s6 + $0x68] sm:$0xff]
      %v3217 = vld [vmem:[%s6 + $0x70] sm:$0xff]
      %v3218 = vld [vmem:[%s6 + $0x78] sm:$0xff]
      %v3219 = vld [vmem:[%s6 + $0x80] sm:$0xff]
      %v3220 = vld [vmem:[%s6 + $0x88] sm:$0xff]
      %v3221 = vld [vmem:[%s6 + $0x90] sm:$0xff]
      %v3222 = vld [vmem:[%s6 + $0x98] sm:$0xff]
      %v3223 = vld [vmem:[%s6 + $0xa0] sm:$0xff]
      %v3224 = vld [vmem:[%s6 + $0xa8] sm:$0xff]
      %v3225 = vld [vmem:[%s6 + $0xb0] sm:$0xff]
      %v3226 = vld [vmem:[%s6 + $0xb8] sm:$0xff]
      %v3227 = vld [vmem:[%s6 + $0xc0] sm:$0xff]
      %v3228 = vld [vmem:[%s6 + $0xc8] sm:$0xff]
      %v3229 = vld [vmem:[%s6 + $0xd0] sm:$0xff]
      %v3230 = vld [vmem:[%s6 + $0xd8] sm:$0xff]
      %v3231 = vld [vmem:[%s6 + $0xe0] sm:$0xff]
      %v3232 = vld [vmem:[%s6 + $0xe8] sm:$0xff]
      %v3233 = vld [vmem:[%s6 + $0xf0] sm:$0xff]
      %v3234 = vld [vmem:[%s6 + $0xf8] sm:$0xff]
      %v3235 = vld [vmem:[%s6 + $0x100] sm:$0xff]
      %v3236 = vld [vmem:[%s6 + $0x108] sm:$0xff]
      %v3237 = vld [vmem:[%s6 + $0x110] sm:$0xff]
      %v3238 = vld [vmem:[%s6 + $0x118] sm:$0xff]
      %v3239 = vld [vmem:[%s6 + $0x120] sm:$0x1]
      %v3240 = vld [vmem:[%s6 + $0x128] sm:$0x1]
      %v3241 = vld [vmem:[%s6 + $0x130] sm:$0x1]
      %v3242 = vld [vmem:[%s6 + $0x138] sm:$0x1]
      %v3243 = vld [vmem:[%s6 + $0x140] sm:$0x1]
      %v3244 = vld [vmem:[%s6 + $0x148] sm:$0x1]
      %v3245 = vadd.f32 %v3161, %v3203
      %v3246 = vadd.f32 %v3162, %v3204
      %v3247 = vadd.f32 %v3163, %v3205
      %v3248 = vadd.f32 %v3164, %v3206
      %v3249 = vadd.f32 %v3165, %v3207
      %v3250 = vadd.f32 %v3166, %v3208
      %v3251 = vadd.f32 %v3167, %v3209
      %v3252 = vadd.f32 %v3168, %v3210
      %v3253 = vadd.f32 %v3169, %v3211
      %v3254 = vadd.f32 %v3170, %v3212
      %v3255 = vadd.f32 %v3171, %v3213
      %v3256 = vadd.f32 %v3172, %v3214
      %v3257 = vadd.f32 %v3173, %v3215
      %v3258 = vadd.f32 %v3174, %v3216
      %v3259 = vadd.f32 %v3175, %v3217
      %v3260 = vadd.f32 %v3176, %v3218
      %v3261 = vadd.f32 %v3177, %v3219
      %v3262 = vadd.f32 %v3178, %v3220
      %v3263 = vadd.f32 %v3179, %v3221
      %v3264 = vadd.f32 %v3180, %v3222
      %v3265 = vadd.f32 %v3181, %v3223
      %v3266 = vadd.f32 %v3182, %v3224
      %v3267 = vadd.f32 %v3183, %v3225
      %v3268 = vadd.f32 %v3184, %v3226
      %v3269 = vadd.f32 %v3185, %v3227
      %v3270 = vadd.f32 %v3186, %v3228
      %v3271 = vadd.f32 %v3187, %v3229
      %v3272 = vadd.f32 %v3188, %v3230
      %v3273 = vadd.f32 %v3189, %v3231
      %v3274 = vadd.f32 %v3190, %v3232
      %v3275 = vadd.f32 %v3191, %v3233
      %v3276 = vadd.f32 %v3192, %v3234
      %v3277 = vadd.f32 %v3193, %v3235
      %v3278 = vadd.f32 %v3194, %v3236
      %v3279 = vadd.f32 %v3195, %v3237
      %v3280 = vadd.f32 %v3196, %v3238
      %v3281 = vadd.f32 %v3197, %v3239
      %v3282 = vadd.f32 %v3198, %v3240
      %v3283 = vadd.f32 %v3199, %v3241
      %v3284 = vadd.f32 %v3200, %v3242
      %v3285 = vadd.f32 %v3201, %v3243
      %v3286 = vadd.f32 %v3202, %v3244
      %v3287 = vpack.c.bf16 %v3251, %v3245
      %v3288 = vpack.c.bf16 %v3252, %v3246
      %v3289 = vpack.c.bf16 %v3253, %v3247
      %v3290 = vpack.c.bf16 %v3254, %v3248
      %v3291 = vpack.c.bf16 %v3255, %v3249
      %v3292 = vpack.c.bf16 %v3256, %v3250
      %v3293 = vpack.c.bf16 %v3263, %v3257
      %v3294 = vpack.c.bf16 %v3264, %v3258
      %v3295 = vpack.c.bf16 %v3265, %v3259
      %v3296 = vpack.c.bf16 %v3266, %v3260
      %v3297 = vpack.c.bf16 %v3267, %v3261
      %v3298 = vpack.c.bf16 %v3268, %v3262
      %v3299 = vpack.c.bf16 %v3275, %v3269
      %v3300 = vpack.c.bf16 %v3276, %v3270
      %v3301 = vpack.c.bf16 %v3277, %v3271
      %v3302 = vpack.c.bf16 %v3278, %v3272
      %v3303 = vpack.c.bf16 %v3279, %v3273
      %v3304 = vpack.c.bf16 %v3280, %v3274
      %v3305 = vpack.c.bf16 %v3281, %v3281
      %v3306 = vpack.c.bf16 %v3282, %v3282
      %v3307 = vpack.c.bf16 %v3283, %v3283
      %v3308 = vpack.c.bf16 %v3284, %v3284
      %v3309 = vpack.c.bf16 %v3285, %v3285
      %v3310 = vpack.c.bf16 %v3286, %v3286
      %v3335 = vunpack.c.l.b16 %v3287
      %v3336 = vunpack.c.l.b16 %v3288
      %v3337 = vunpack.c.l.b16 %v3289
      %v3338 = vunpack.c.l.b16 %v3290
      %v3339 = vunpack.c.l.b16 %v3291
      %v3340 = vunpack.c.l.b16 %v3292
      %v3341 = vunpack.c.h.b16 %v3287
      %v3342 = vunpack.c.h.b16 %v3288
      %v3343 = vunpack.c.h.b16 %v3289
      %v3344 = vunpack.c.h.b16 %v3290
      %v3345 = vunpack.c.h.b16 %v3291
      %v3346 = vunpack.c.h.b16 %v3292
      %v3347 = vunpack.c.l.b16 %v3293
      %v3348 = vunpack.c.l.b16 %v3294
      %v3349 = vunpack.c.l.b16 %v3295
      %v3350 = vunpack.c.l.b16 %v3296
      %v3351 = vunpack.c.l.b16 %v3297
      %v3352 = vunpack.c.l.b16 %v3298
      %v3353 = vunpack.c.h.b16 %v3293
      %v3354 = vunpack.c.h.b16 %v3294
      %v3355 = vunpack.c.h.b16 %v3295
      %v3356 = vunpack.c.h.b16 %v3296
      %v3357 = vunpack.c.h.b16 %v3297
      %v3358 = vunpack.c.h.b16 %v3298
      %v3359 = vunpack.c.l.b16 %v3299
      %v3360 = vunpack.c.l.b16 %v3300
      %v3361 = vunpack.c.l.b16 %v3301
      %v3362 = vunpack.c.l.b16 %v3302
      %v3363 = vunpack.c.l.b16 %v3303
      %v3364 = vunpack.c.l.b16 %v3304
      %v3365 = vunpack.c.h.b16 %v3299
      %v3366 = vunpack.c.h.b16 %v3300
      %v3367 = vunpack.c.h.b16 %v3301
      %v3368 = vunpack.c.h.b16 %v3302
      %v3369 = vunpack.c.h.b16 %v3303
      %v3370 = vunpack.c.h.b16 %v3304
      %v3371 = vunpack.c.l.b16 %v3305
      %v3372 = vunpack.c.l.b16 %v3306
      %v3373 = vunpack.c.l.b16 %v3307
      %v3374 = vunpack.c.l.b16 %v3308
      %v3375 = vunpack.c.l.b16 %v3309
      %v3376 = vunpack.c.l.b16 %v3310
      %v3377 = vpack.c.b16 %v3336, %v3335
      %v3378 = vpack.c.b16 %v3338, %v3337
      %v3379 = vpack.c.b16 %v3340, %v3339
      %v3380 = vpack.c.b16 %v3342, %v3341
      %v3381 = vpack.c.b16 %v3344, %v3343
      %v3382 = vpack.c.b16 %v3346, %v3345
      %v3383 = vpack.c.b16 %v3348, %v3347
      %v3384 = vpack.c.b16 %v3350, %v3349
      %v3385 = vpack.c.b16 %v3352, %v3351
      %v3386 = vpack.c.b16 %v3354, %v3353
      %v3387 = vpack.c.b16 %v3356, %v3355
      %v3388 = vpack.c.b16 %v3358, %v3357
      %v3389 = vpack.c.b16 %v3360, %v3359
      %v3390 = vpack.c.b16 %v3362, %v3361
      %v3391 = vpack.c.b16 %v3364, %v3363
      %v3392 = vpack.c.b16 %v3366, %v3365
      %v3393 = vpack.c.b16 %v3368, %v3367
      %v3394 = vpack.c.b16 %v3370, %v3369
      %v3395 = vpack.c.b16 %v3372, %v3371
      %v3396 = vpack.c.b16 %v3374, %v3373
      %v3397 = vpack.c.b16 %v3376, %v3375
      %3419 = vst [vmem:[%s298] sm:$0xff] %v3377
      %3420 = vst [vmem:[%s298 + $0x8] sm:$0xff] %v3378
      %3421 = vst [vmem:[%s298 + $0x10] sm:$0xff] %v3379
      %3422 = vst [vmem:[%s298 + $0x18] sm:$0xff] %v3380
      %3423 = vst [vmem:[%s298 + $0x20] sm:$0xff] %v3381
      %3424 = vst [vmem:[%s298 + $0x28] sm:$0xff] %v3382
      %3425 = vst [vmem:[%s298 + $0x30] sm:$0xff] %v3383
      %3426 = vst [vmem:[%s298 + $0x38] sm:$0xff] %v3384
      %3427 = vst [vmem:[%s298 + $0x40] sm:$0xff] %v3385
      %3428 = vst [vmem:[%s298 + $0x48] sm:$0xff] %v3386
      %3429 = vst [vmem:[%s298 + $0x50] sm:$0xff] %v3387
      %3430 = vst [vmem:[%s298 + $0x58] sm:$0xff] %v3388
      %3431 = vst [vmem:[%s298 + $0x60] sm:$0xff] %v3389
      %3432 = vst [vmem:[%s298 + $0x68] sm:$0xff] %v3390
      %3433 = vst [vmem:[%s298 + $0x70] sm:$0xff] %v3391
      %3434 = vst [vmem:[%s298 + $0x78] sm:$0xff] %v3392
      %3435 = vst [vmem:[%s298 + $0x80] sm:$0xff] %v3393
      %3436 = vst [vmem:[%s298 + $0x88] sm:$0xff] %v3394
      %vm3437 = vcmask 1040384
      %vm3438 = vsmask.f32 256
      %vm3439 = vmand %vm3437, %vm3438
      %vm3440 = vcmask 1044484
      %vm3441 = vsmask.f32 4352
      %vm3442 = vmand %vm3440, %vm3441
      %vm3443 = vmor %vm3442, %vm3439
      %v3444 = vld [vmem:[%s298 + $0x90] sm:$0x11]
      %v3445 = vsel %vm3443, %v3395, %v3444
      %3446 = vst [vmem:[%s298 + $0x90] sm:$0x11] %v3445
      %v3447 = vld [vmem:[%s298 + $0x98] sm:$0x11]
      %v3448 = vsel %vm3443, %v3396, %v3447
      %3449 = vst [vmem:[%s298 + $0x98] sm:$0x11] %v3448
      %v3450 = vld [vmem:[%s298 + $0xa0] sm:$0x11]
      %v3451 = vsel %vm3443, %v3397, %v3450
      %3452 = vst [vmem:[%s298 + $0xa0] sm:$0x11] %v3451
      %p3453 = scmp.lt.s32.totalorder %s18, 1
      %s3454 = scalar_select %p3453, %s18, 1
      %s3455 = smul.addr %s3454, 42
      %s3456 = smul.addr %s3455, 4
      %s3457 = scalar_lea.vmem %s7, %s3456
      // Predicated region
      $region49: #{_combine_block_impl.1} parent=47 // pred_check
        %p3458 = pneg %p193
      $region50: #{_combine_block_impl.1} parent=47 // pred_check_branch
        %3460 = sbr.rel (%p3458) target = $region52
      $region51: #{_combine_block_impl.1} parent=47 // pred_region
        _
      $region52: #{_combine_block_impl.1} parent=47 // pred_fallthru
        _
    $region48: #{_combine_block_impl.1} parent=5 // pred_fallthru
      _
    %p3461 = scmp.le.s32.totalorder 2, %s13
    // Predicated region
    $region53: #{_combine_block_impl.1} parent=5 // pred_check
      %p3462 = pneg %p3461
    $region54: #{_combine_block_impl.1} parent=5 // pred_check_branch
      %3464 = sbr.rel (%p3462) target = $region56
    $region55: #{_combine_block_impl.1} parent=5 // pred_region
      %s3465 = ssub.s32 %s13, 2
      // Predicated region
      $region57: #{_combine_block_impl.1} parent=55 // pred_check
        %p3466 = pneg %p199
      $region58: #{_combine_block_impl.1} parent=55 // pred_check_branch
        %3468 = sbr.rel (%p3466) target = $region60
      $region59: #{_combine_block_impl.1} parent=55 // pred_region
        %p3469 = scmp.lt.s32.totalorder %s19, 1
        %s3470 = scalar_select %p3469, %s19, 1
        %s3471 = smul.addr %s3470, 42
        %s3472 = smul.addr %s3471, 4
        %s3473 = scalar_lea.vmem %s7, %s3472
      $region60: #{_combine_block_impl.1} parent=55 // pred_fallthru
        _
    $region56: #{_combine_block_impl.1} parent=5 // pred_fallthru
      _
  $region6: #{_combine_block_impl.1} parent=0 // loop_footer
    %s17 = sadd.s32 1, %s13
  $region7: #{_combine_block_impl.1} parent=0 // loop_footer_branch
    %12 = sbr.rel target = $region3
  $region8: #{_combine_block_impl.1} parent=0 // loop_exit
    _

</llo_original>
